<compile_context>
chip_gen: v7x
topology: tpu7x:2x2x1
jax: 0.10.0
libtpu: 0.0.40
codegen_flags: <defaults>
</compile_context>

<pallas_src>
import jax
import jax.numpy as jnp
from jax.experimental import pallas as pl
from jax.experimental.pallas import tpu as pltpu

KS = 7                 # CBAM SpatialGate kernel size
PAD = (KS - 1) // 2    # = 3
EPS = 1e-5


def _res_cbam_kernel(x_ref, pflip_ref,
                     w1t_ref, b1_ref, w2t_ref, b2_ref,
                     kmax_ref, kmean_ref, spshift_ref,
                     w1x1_ref, bn1b_ref,
                     o_ref):
    HW = x_ref.shape[2]

    x = x_ref[0].astype(jnp.float32)                      # (C, HW), lane dense

    # ---- x - flip_w(x): width reverse done in-kernel on the resident tile via
    # a permutation matmul (no second HBM input).
    d = x - jnp.dot(x, pflip_ref[...], preferred_element_type=jnp.float32)

    # ---------------- Channel gate (avg & max pool -> shared MLP) ------------
    avg_col = jnp.sum(d, axis=1, keepdims=True) * (1.0 / HW)   # (C, 1)
    max_col = jnp.max(d, axis=1, keepdims=True)                # (C, 1)

    w1t = w1t_ref[...]    # (hidden, C)
    b1 = b1_ref[...]      # (hidden, 1)
    w2t = w2t_ref[...]    # (C, hidden)
    b2 = b2_ref[...]      # (C, 1)

    def mlp(v_col):                                            # (C,1) -> (C,1)
        h = jnp.dot(w1t, v_col, preferred_element_type=jnp.float32) + b1
        h = jnp.maximum(h, 0.0)
        return jnp.dot(w2t, h, preferred_element_type=jnp.float32) + b2

    ca = jax.nn.sigmoid(mlp(avg_col) + mlp(max_col))           # (C, 1)
    xc = d * ca                                                # (C, HW)

    # ---------------- Spatial gate (channel max/mean -> folded 7x7 conv) -----
    cmax = jnp.max(xc, axis=0, keepdims=True)                  # (1, HW)
    cmean = jnp.mean(xc, axis=0, keepdims=True)                # (1, HW)
    # Spatial-BN scale already folded into kmax/kmean in the wrapper; only the
    # shift remains (SMEM scalar).
    conv = (jnp.dot(cmax, kmax_ref[...], preferred_element_type=jnp.float32)
            + jnp.dot(cmean, kmean_ref[...], preferred_element_type=jnp.float32))
    sgate = jax.nn.sigmoid(conv + spshift_ref[0])              # (1, HW)
    xs = xc * sgate                                            # (C, HW)

    # ---------------- 1x1 conv + BN + ReLU + residual (one matmul, one store)
    # BN1 scale is pre-folded into w1x1 in the wrapper; only bias + ReLU here.
    y = jnp.dot(w1x1_ref[...], xs, preferred_element_type=jnp.float32)  # (C, HW)
    y = jnp.maximum(y + bn1b_ref[...], 0.0)
    # TODO(synk): DropPath (stochastic depth) / BN batch-stats of train mode
    # have no deterministic kernel equivalent; inference mode is implemented.
    o_ref[0] = (x + y).astype(o_ref.dtype)


def _flip_w_matrix(H, W):
    """(HW, HW) permutation P so that (x2d @ P) reverses W within each H row."""
    HW = H * W
    d_idx = jnp.arange(HW)
    src = (d_idx // W) * W + (W - 1 - d_idx % W)
    return (jnp.arange(HW)[:, None] == src[None, :]).astype(jnp.float32)


def _spatial_conv_matrices(wsp, H, W):
    """Fold the 2-in/1-out 7x7 zero-padded conv into two (HW, HW) operators.

    conv_flat = cmax_flat @ K_max + cmean_flat @ K_mean
    """
    wsp2 = wsp.reshape(2, KS, KS)
    off = jnp.arange(KS) - PAD
    dh = jnp.arange(H)
    dw = jnp.arange(W)
    # Ah[kh, sh, dh] = 1 iff sh == dh + kh - PAD (zero padding handled by OOB miss)
    Ah = ((dh[None, :, None] - dh[None, None, :]) == off[:, None, None]).astype(jnp.float32)
    Aw = ((dw[None, :, None] - dw[None, None, :]) == off[:, None, None]).astype(jnp.float32)
    # K[c, sh, sw, dh, dw] = sum_{kh,kw} wsp2[c,kh,kw] * Ah[kh,sh,dh] * Aw[kw,sw,dw]
    K = jnp.einsum('cij,iab,jpq->capbq', wsp2, Ah, Aw)
    K = K.reshape(2, H * W, H * W)
    return K[0], K[1]


def res_cbam_forward(x, params):
    B, C, H, W = x.shape
    HW = H * W
    x3 = x.reshape(B, C, HW)            # free reshape: lane axis becomes H*W
    hidden = params["w1t"].shape[0]

    pflip = _flip_w_matrix(H, W)
    kmax, kmean = _spatial_conv_matrices(params["wsp"], H, W)

    # Fold spatial-BN scale into the conv operators; keep only the shift scalar.
    sp_scale = params["spbn"][0]
    kmax = kmax * sp_scale
    kmean = kmean * sp_scale
    spshift = params["spbn"][1:2]                         # (1,) f32 -> SMEM

    # Fold BN1 scale into the 1x1-conv weight (row scaling per output channel).
    w1x1_f = params["w1x1"] * params["bn1_s"]             # (C, C)

    def full(shape):
        n = len(shape)
        return pl.BlockSpec(shape, lambda b, n=n: (0,) * n)

    smem = pl.BlockSpec(memory_space=pltpu.MemorySpace.SMEM)
    blk = pl.BlockSpec((1, C, HW), lambda b: (b, 0, 0))

    out = pl.pallas_call(
        _res_cbam_kernel,
        out_shape=jax.ShapeDtypeStruct((B, C, HW), x.dtype),
        grid=(B,),
        in_specs=[
            blk,                      # x, (B, C, H*W)
            full((HW, HW)),           # width-flip permutation
            full((hidden, C)),        # channel-gate MLP W1
            full((hidden, 1)),        # b1
            full((C, hidden)),        # W2
            full((C, 1)),             # b2
            full((HW, HW)),           # folded (scaled) 7x7 conv operator (max plane)
            full((HW, HW)),           # folded (scaled) 7x7 conv operator (mean plane)
            smem,                     # spatial BN folded shift (scalar)
            full((C, C)),             # 1x1 conv weight * folded BN1 scale
            full((C, 1)),             # bn1 folded shift
        ],
        out_specs=blk,
        compiler_params=pltpu.CompilerParams(dimension_semantics=("parallel",)),
    )(x3, pflip, params["w1t"], params["b1"], params["w2t"], params["b2"],
      kmax, kmean, spshift, w1x1_f, params["bn1_b"])
    return out.reshape(B, C, H, W)


def make_params(key, C, reduction_ratio=16):
    hidden = max(C // reduction_ratio, 1)
    ks = jax.random.split(key, 14)

    w1t = 0.2 * jax.random.normal(ks[0], (hidden, C), jnp.float32)
    b1 = 0.1 * jax.random.normal(ks[1], (hidden, 1), jnp.float32)
    w2t = 0.2 * jax.random.normal(ks[2], (C, hidden), jnp.float32)
    b2 = 0.1 * jax.random.normal(ks[3], (C, 1), jnp.float32)

    wsp = 0.2 * jax.random.normal(ks[4], (2 * KS * KS,), jnp.float32)
    sp_gamma = 1.0 + 0.1 * jax.random.normal(ks[5], (), jnp.float32)
    sp_beta = 0.1 * jax.random.normal(ks[6], (), jnp.float32)
    sp_mean = 0.1 * jax.random.normal(ks[7], (), jnp.float32)
    sp_var = 1.0 + 0.1 * jnp.abs(jax.random.normal(ks[8], (), jnp.float32))
    sp_scale = sp_gamma / jnp.sqrt(sp_var + EPS)
    sp_shift = sp_beta - sp_mean * sp_scale
    spbn = jnp.stack([sp_scale, sp_shift]).astype(jnp.float32)

    w1x1 = jax.random.normal(ks[9], (C, C), jnp.float32) / jnp.sqrt(C)
    g = 1.0 + 0.1 * jax.random.normal(ks[10], (C,), jnp.float32)
    beta = 0.1 * jax.random.normal(ks[11], (C,), jnp.float32)
    mean = 0.1 * jax.random.normal(ks[12], (C,), jnp.float32)
    var = 1.0 + 0.1 * jnp.abs(jax.random.normal(ks[13], (C,), jnp.float32))
    s = g / jnp.sqrt(var + EPS)
    bn1_s = s.reshape(C, 1)
    bn1_b = (beta - mean * s).reshape(C, 1)

    return dict(w1t=w1t, b1=b1, w2t=w2t, b2=b2, wsp=wsp, spbn=spbn,
                w1x1=w1x1, bn1_s=bn1_s, bn1_b=bn1_b)


def res_cbam_reference(x, p):
    """Pure-JAX reference mirroring the PyTorch forward (eval mode)."""
    d = x - jnp.flip(x, axis=3)
    avg = d.mean(axis=(2, 3))
    mx = d.max(axis=(2, 3))

    def mlp(v):
        h = jax.nn.relu(v @ p["w1t"].T + p["b1"][:, 0])
        return h @ p["w2t"].T + p["b2"][:, 0]

    ca = jax.nn.sigmoid(mlp(avg) + mlp(mx))
    xc = d * ca[:, :, None, None]

    pooled = jnp.stack([xc.max(axis=1), xc.mean(axis=1)], axis=1)   # (B,2,H,W)
    wsp = p["wsp"].reshape(1, 2, KS, KS)
    conv = jax.lax.conv_general_dilated(
        pooled, wsp, window_strides=(1, 1),
        padding=((PAD, PAD), (PAD, PAD)),
        dimension_numbers=("NCHW", "OIHW", "NCHW"))
    sg = jax.nn.sigmoid(conv * p["spbn"][0] + p["spbn"][1])
    xs = xc * sg

    y = jnp.einsum("oc,bchw->bohw", p["w1x1"], xs)
    y = jax.nn.relu(y * p["bn1_s"][:, 0][None, :, None, None]
                    + p["bn1_b"][:, 0][None, :, None, None])
    return x + y


if __name__ == "__main__":
    B, C, H, W = 2, 32, 16, 16     # gate_channels=32 so reduction 16 -> hidden=2
    key = jax.random.PRNGKey(0)
    kx, kp = jax.random.split(key)
    x = jax.random.normal(kx, (B, C, H, W), jnp.float32)
    params = make_params(kp, C)

    out = jax.jit(res_cbam_forward)(x, params)
    out = jax.block_until_ready(out)

    ref = res_cbam_reference(x, params)
    err = float(jnp.max(jnp.abs(out - ref)))
    assert err < 5e-2, f"kernel/reference mismatch: max abs err = {err}"
    print("KERNEL_OK")
</pallas_src>

<mosaic_0001>
module attributes {stable_mosaic.version = 11 : i64} {
  func.func @_res_cbam_kernel(%arg0: i32, %arg1: memref<1x32x256xf32, #tpu.memory_space<vmem>>, %arg2: memref<256x256xf32, #tpu.memory_space<vmem>>, %arg3: memref<2x32xf32, #tpu.memory_space<vmem>>, %arg4: memref<2x1xf32, #tpu.memory_space<vmem>>, %arg5: memref<32x2xf32, #tpu.memory_space<vmem>>, %arg6: memref<32x1xf32, #tpu.memory_space<vmem>>, %arg7: memref<256x256xf32, #tpu.memory_space<vmem>>, %arg8: memref<256x256xf32, #tpu.memory_space<vmem>>, %arg9: memref<1xf32, #tpu.memory_space<smem>>, %arg10: memref<32x32xf32, #tpu.memory_space<vmem>>, %arg11: memref<32x1xf32, #tpu.memory_space<vmem>>, %arg12: memref<1x32x256xf32, #tpu.memory_space<vmem>>) attributes {dimension_semantics = [#tpu.dimension_semantics<parallel>], iteration_bounds = array<i64: 2>, scalar_prefetch = 0 : i64, scratch_operands = 0 : i64, tpu.core_type = #tpu.core_type<tc>, window_params = [{transform_indices = @transform_0, window_bounds = array<i64: 1, 32, 256>}, {pipeline_mode = #tpu.pipeline_mode<synchronous>, transform_indices = @transform_1, window_bounds = array<i64: 256, 256>}, {pipeline_mode = #tpu.pipeline_mode<synchronous>, transform_indices = @transform_2, window_bounds = array<i64: 2, 32>}, {pipeline_mode = #tpu.pipeline_mode<synchronous>, transform_indices = @transform_3, window_bounds = array<i64: 2, 1>}, {pipeline_mode = #tpu.pipeline_mode<synchronous>, transform_indices = @transform_4, window_bounds = array<i64: 32, 2>}, {pipeline_mode = #tpu.pipeline_mode<synchronous>, transform_indices = @transform_5, window_bounds = array<i64: 32, 1>}, {pipeline_mode = #tpu.pipeline_mode<synchronous>, transform_indices = @transform_6, window_bounds = array<i64: 256, 256>}, {pipeline_mode = #tpu.pipeline_mode<synchronous>, transform_indices = @transform_7, window_bounds = array<i64: 256, 256>}, {transform_indices = @transform_8, window_bounds = array<i64: 1>}, {pipeline_mode = #tpu.pipeline_mode<synchronous>, transform_indices = @transform_9, window_bounds = array<i64: 32, 32>}, {pipeline_mode = #tpu.pipeline_mode<synchronous>, transform_indices = @transform_10, window_bounds = array<i64: 32, 1>}, {transform_indices = @transform_11, window_bounds = array<i64: 1, 32, 256>}]} {
    %c0 = arith.constant 0 : index
    %c0_0 = arith.constant 0 : index
    %c0_1 = arith.constant 0 : index
    %0 = vector.load %arg1[%c0, %c0_0, %c0_1] : memref<1x32x256xf32, #tpu.memory_space<vmem>>, vector<1x32x256xf32>
    %1 = vector.shape_cast %0 : vector<1x32x256xf32> to vector<32x256xf32>
    %c0_2 = arith.constant 0 : index
    %c0_3 = arith.constant 0 : index
    %2 = vector.load %arg2[%c0_2, %c0_3] : memref<256x256xf32, #tpu.memory_space<vmem>>, vector<256x256xf32>
    %cst = arith.constant dense<0.000000e+00> : vector<32x256xf32>
    %3 = tpu.matmul %1, %2, %cst {dimension_numbers = #tpu.dot_dimension_numbers<[1], [0], [0], [1], [0, 0, 1, 1], [], []>} : vector<32x256xf32>, vector<256x256xf32>, vector<32x256xf32> -> vector<32x256xf32>
    %4 = arith.subf %1, %3 : vector<32x256xf32>
    %cst_4 = arith.constant dense<0.000000e+00> : vector<32xf32>
    %5 = vector.multi_reduction <add>, %4, %cst_4 [1] : vector<32x256xf32> to vector<32xf32>
    %6 = vector.shape_cast %5 : vector<32xf32> to vector<32x1xf32>
    %cst_5 = arith.constant 3.906250e-03 : f32
    %7 = vector.broadcast %cst_5 : f32 to vector<32x1xf32>
    %8 = arith.mulf %6, %7 : vector<32x1xf32>
    %cst_6 = arith.constant dense<0xFF800000> : vector<32xf32>
    %9 = vector.multi_reduction <maximumf>, %4, %cst_6 [1] : vector<32x256xf32> to vector<32xf32>
    %10 = vector.shape_cast %9 : vector<32xf32> to vector<32x1xf32>
    %c0_7 = arith.constant 0 : index
    %c0_8 = arith.constant 0 : index
    %11 = vector.load %arg3[%c0_7, %c0_8] : memref<2x32xf32, #tpu.memory_space<vmem>>, vector<2x32xf32>
    %c0_9 = arith.constant 0 : index
    %c0_10 = arith.constant 0 : index
    %12 = vector.load %arg4[%c0_9, %c0_10] : memref<2x1xf32, #tpu.memory_space<vmem>>, vector<2x1xf32>
    %c0_11 = arith.constant 0 : index
    %c0_12 = arith.constant 0 : index
    %13 = vector.load %arg5[%c0_11, %c0_12] : memref<32x2xf32, #tpu.memory_space<vmem>>, vector<32x2xf32>
    %c0_13 = arith.constant 0 : index
    %c0_14 = arith.constant 0 : index
    %14 = vector.load %arg6[%c0_13, %c0_14] : memref<32x1xf32, #tpu.memory_space<vmem>>, vector<32x1xf32>
    %cst_15 = arith.constant dense<0.000000e+00> : vector<2x1xf32>
    %15 = tpu.matmul %11, %8, %cst_15 {dimension_numbers = #tpu.dot_dimension_numbers<[1], [0], [0], [1], [0, 0, 1, 1], [], []>} : vector<2x32xf32>, vector<32x1xf32>, vector<2x1xf32> -> vector<2x1xf32>
    %16 = arith.addf %15, %12 : vector<2x1xf32>
    %cst_16 = arith.constant 0.000000e+00 : f32
    %17 = vector.broadcast %cst_16 : f32 to vector<2x1xf32>
    %18 = arith.maximumf %16, %17 : vector<2x1xf32>
    %cst_17 = arith.constant dense<0.000000e+00> : vector<32x1xf32>
    %19 = tpu.matmul %13, %18, %cst_17 {dimension_numbers = #tpu.dot_dimension_numbers<[1], [0], [0], [1], [0, 0, 1, 1], [], []>} : vector<32x2xf32>, vector<2x1xf32>, vector<32x1xf32> -> vector<32x1xf32>
    %20 = arith.addf %19, %14 : vector<32x1xf32>
    %cst_18 = arith.constant dense<0.000000e+00> : vector<2x1xf32>
    %21 = tpu.matmul %11, %10, %cst_18 {dimension_numbers = #tpu.dot_dimension_numbers<[1], [0], [0], [1], [0, 0, 1, 1], [], []>} : vector<2x32xf32>, vector<32x1xf32>, vector<2x1xf32> -> vector<2x1xf32>
    %22 = arith.addf %21, %12 : vector<2x1xf32>
    %cst_19 = arith.constant 0.000000e+00 : f32
    %23 = vector.broadcast %cst_19 : f32 to vector<2x1xf32>
    %24 = arith.maximumf %22, %23 : vector<2x1xf32>
    %cst_20 = arith.constant dense<0.000000e+00> : vector<32x1xf32>
    %25 = tpu.matmul %13, %24, %cst_20 {dimension_numbers = #tpu.dot_dimension_numbers<[1], [0], [0], [1], [0, 0, 1, 1], [], []>} : vector<32x2xf32>, vector<2x1xf32>, vector<32x1xf32> -> vector<32x1xf32>
    %26 = arith.addf %25, %14 : vector<32x1xf32>
    %27 = arith.addf %20, %26 : vector<32x1xf32>
    %28 = arith.negf %27 : vector<32x1xf32>
    %29 = math.exp %28 : vector<32x1xf32>
    %cst_21 = arith.constant 1.000000e+00 : f32
    %30 = vector.broadcast %cst_21 : f32 to vector<32x1xf32>
    %31 = arith.addf %30, %29 : vector<32x1xf32>
    %32 = arith.divf %30, %31 : vector<32x1xf32>
    %33 = vector.broadcast %32 : vector<32x1xf32> to vector<32x256xf32>
    %34 = arith.mulf %4, %33 : vector<32x256xf32>
    %cst_22 = arith.constant dense<0xFF800000> : vector<256xf32>
    %35 = vector.multi_reduction <maximumf>, %34, %cst_22 [0] : vector<32x256xf32> to vector<256xf32>
    %36 = vector.shape_cast %35 : vector<256xf32> to vector<1x256xf32>
    %cst_23 = arith.constant dense<0.000000e+00> : vector<256xf32>
    %37 = vector.multi_reduction <add>, %34, %cst_23 [0] : vector<32x256xf32> to vector<256xf32>
    %38 = vector.shape_cast %37 : vector<256xf32> to vector<1x256xf32>
    %cst_24 = arith.constant 3.200000e+01 : f32
    %39 = vector.broadcast %cst_24 : f32 to vector<1x256xf32>
    %40 = arith.divf %38, %39 : vector<1x256xf32>
    %c0_25 = arith.constant 0 : index
    %c0_26 = arith.constant 0 : index
    %41 = vector.load %arg7[%c0_25, %c0_26] : memref<256x256xf32, #tpu.memory_space<vmem>>, vector<256x256xf32>
    %cst_27 = arith.constant dense<0.000000e+00> : vector<1x256xf32>
    %42 = tpu.matmul %36, %41, %cst_27 {dimension_numbers = #tpu.dot_dimension_numbers<[1], [0], [0], [1], [0, 0, 1, 1], [], []>} : vector<1x256xf32>, vector<256x256xf32>, vector<1x256xf32> -> vector<1x256xf32>
    %c0_28 = arith.constant 0 : index
    %c0_29 = arith.constant 0 : index
    %43 = vector.load %arg8[%c0_28, %c0_29] : memref<256x256xf32, #tpu.memory_space<vmem>>, vector<256x256xf32>
    %cst_30 = arith.constant dense<0.000000e+00> : vector<1x256xf32>
    %44 = tpu.matmul %40, %43, %cst_30 {dimension_numbers = #tpu.dot_dimension_numbers<[1], [0], [0], [1], [0, 0, 1, 1], [], []>} : vector<1x256xf32>, vector<256x256xf32>, vector<1x256xf32> -> vector<1x256xf32>
    %45 = arith.addf %42, %44 : vector<1x256xf32>
    %c0_31 = arith.constant 0 : index
    %46 = memref.load %arg9[%c0_31] : memref<1xf32, #tpu.memory_space<smem>>
    %47 = vector.broadcast %46 : f32 to vector<1x256xf32>
    %48 = arith.addf %45, %47 : vector<1x256xf32>
    %49 = arith.negf %48 : vector<1x256xf32>
    %50 = math.exp %49 : vector<1x256xf32>
    %cst_32 = arith.constant 1.000000e+00 : f32
    %51 = vector.broadcast %cst_32 : f32 to vector<1x256xf32>
    %52 = arith.addf %51, %50 : vector<1x256xf32>
    %53 = arith.divf %51, %52 : vector<1x256xf32>
    %54 = vector.broadcast %53 : vector<1x256xf32> to vector<32x256xf32>
    %55 = arith.mulf %34, %54 : vector<32x256xf32>
    %c0_33 = arith.constant 0 : index
    %c0_34 = arith.constant 0 : index
    %56 = vector.load %arg10[%c0_33, %c0_34] : memref<32x32xf32, #tpu.memory_space<vmem>>, vector<32x32xf32>
    %cst_35 = arith.constant dense<0.000000e+00> : vector<32x256xf32>
    %57 = tpu.matmul %56, %55, %cst_35 {dimension_numbers = #tpu.dot_dimension_numbers<[1], [0], [0], [1], [0, 0, 1, 1], [], []>} : vector<32x32xf32>, vector<32x256xf32>, vector<32x256xf32> -> vector<32x256xf32>
    %c0_36 = arith.constant 0 : index
    %c0_37 = arith.constant 0 : index
    %58 = vector.load %arg11[%c0_36, %c0_37] : memref<32x1xf32, #tpu.memory_space<vmem>>, vector<32x1xf32>
    %59 = vector.broadcast %58 : vector<32x1xf32> to vector<32x256xf32>
    %60 = arith.addf %57, %59 : vector<32x256xf32>
    %cst_38 = arith.constant 0.000000e+00 : f32
    %61 = vector.broadcast %cst_38 : f32 to vector<32x256xf32>
    %62 = arith.maximumf %60, %61 : vector<32x256xf32>
    %63 = arith.addf %1, %62 : vector<32x256xf32>
    %c0_39 = arith.constant 0 : index
    %c0_40 = arith.constant 0 : index
    %c0_41 = arith.constant 0 : index
    %64 = vector.load %arg12[%c0_39, %c0_40, %c0_41] : memref<1x32x256xf32, #tpu.memory_space<vmem>>, vector<1x32x256xf32>
    %65 = vector.shape_cast %64 : vector<1x32x256xf32> to vector<32x256xf32>
    %66 = vector.shape_cast %63 : vector<32x256xf32> to vector<1x32x256xf32>
    tpu.vector_store %arg12[%c0_39, %c0_40, %c0_41], %66 {strides = array<i32>} : memref<1x32x256xf32, #tpu.memory_space<vmem>>, vector<1x32x256xf32>,
    return
  }
  func.func @transform_0(%arg0: i32) -> (i32, i32, i32) {
    %c0_i32 = arith.constant 0 : i32
    %c0_i32_0 = arith.constant 0 : i32
    %c0_i32_1 = arith.constant 0 : i32
    return %arg0, %c0_i32, %c0_i32_0 : i32, i32, i32
  }
  func.func @transform_1(%arg0: i32) -> (i32, i32) {
    %c0_i32 = arith.constant 0 : i32
    %c0_i32_0 = arith.constant 0 : i32
    %c0_i32_1 = arith.constant 0 : i32
    return %c0_i32, %c0_i32_0 : i32, i32
  }
  func.func @transform_2(%arg0: i32) -> (i32, i32) {
    %c0_i32 = arith.constant 0 : i32
    %c0_i32_0 = arith.constant 0 : i32
    %c0_i32_1 = arith.constant 0 : i32
    return %c0_i32, %c0_i32_0 : i32, i32
  }
  func.func @transform_3(%arg0: i32) -> (i32, i32) {
    %c0_i32 = arith.constant 0 : i32
    %c0_i32_0 = arith.constant 0 : i32
    %c0_i32_1 = arith.constant 0 : i32
    return %c0_i32, %c0_i32_0 : i32, i32
  }
  func.func @transform_4(%arg0: i32) -> (i32, i32) {
    %c0_i32 = arith.constant 0 : i32
    %c0_i32_0 = arith.constant 0 : i32
    %c0_i32_1 = arith.constant 0 : i32
    return %c0_i32, %c0_i32_0 : i32, i32
  }
  func.func @transform_5(%arg0: i32) -> (i32, i32) {
    %c0_i32 = arith.constant 0 : i32
    %c0_i32_0 = arith.constant 0 : i32
    %c0_i32_1 = arith.constant 0 : i32
    return %c0_i32, %c0_i32_0 : i32, i32
  }
  func.func @transform_6(%arg0: i32) -> (i32, i32) {
    %c0_i32 = arith.constant 0 : i32
    %c0_i32_0 = arith.constant 0 : i32
    %c0_i32_1 = arith.constant 0 : i32
    return %c0_i32, %c0_i32_0 : i32, i32
  }
  func.func @transform_7(%arg0: i32) -> (i32, i32) {
    %c0_i32 = arith.constant 0 : i32
    %c0_i32_0 = arith.constant 0 : i32
    %c0_i32_1 = arith.constant 0 : i32
    return %c0_i32, %c0_i32_0 : i32, i32
  }
  func.func @transform_8(%arg0: i32) -> i32 {
    %c0_i32 = arith.constant 0 : i32
    %c0_i32_0 = arith.constant 0 : i32
    return %c0_i32 : i32
  }
  func.func @transform_9(%arg0: i32) -> (i32, i32) {
    %c0_i32 = arith.constant 0 : i32
    %c0_i32_0 = arith.constant 0 : i32
    %c0_i32_1 = arith.constant 0 : i32
    return %c0_i32, %c0_i32_0 : i32, i32
  }
  func.func @transform_10(%arg0: i32) -> (i32, i32) {
    %c0_i32 = arith.constant 0 : i32
    %c0_i32_0 = arith.constant 0 : i32
    %c0_i32_1 = arith.constant 0 : i32
    return %c0_i32, %c0_i32_0 : i32, i32
  }
  func.func @transform_11(%arg0: i32) -> (i32, i32, i32) {
    %c0_i32 = arith.constant 0 : i32
    %c0_i32_0 = arith.constant 0 : i32
    %c0_i32_1 = arith.constant 0 : i32
    return %arg0, %c0_i32, %c0_i32_0 : i32, i32, i32
  }
}

</mosaic_0001>

<llo_original>
// kernel: res_cbam_forward.1
$region0: #{res_cbam_forward.1}
  #allocation0 [shape = 'u32[]', space=smem, size = 0x4, offset = 0x4, fixed_abs, tag = 'smem constant byte address 0x4 - core index']
  #allocation1 [shape = 'u32[144,128]{1,0:T(1,128)}', space=vmem, size = 0x12000, scoped, tag = 'internal scratch']
  #allocation2 [shape = 'f32[1]{0:T(128)S(6)}', space=smem, size = 0x200, scoped, tag = 'scoped memory for res_cbam_forward.1']
  %s0 = inlined_call_operand.vmem [shape: f32[2,32,256], index: 0, kind: input, shape index: {}]
  %s1 = inlined_call_operand.vmem [shape: f32[256,256], index: 1, kind: input, shape index: {}]
  %s2 = inlined_call_operand.vmem [shape: f32[2,32], index: 2, kind: input, shape index: {}]
  %s3 = inlined_call_operand.vmem [shape: f32[2,1], index: 3, kind: input, shape index: {}]
  %s4 = inlined_call_operand.vmem [shape: f32[32,2], index: 4, kind: input, shape index: {}]
  %s5 = inlined_call_operand.vmem [shape: f32[32,1], index: 5, kind: input, shape index: {}]
  %s6 = inlined_call_operand.vmem [shape: f32[256,256], index: 6, kind: input, shape index: {}]
  %s7 = inlined_call_operand.vmem [shape: f32[256,256], index: 7, kind: input, shape index: {}]
  %s8 = inlined_call_operand.<no memory space> [shape: f32[1], index: 8, kind: input, shape index: {}]
  %s9 = inlined_call_operand.vmem [shape: f32[32,32], index: 9, kind: input, shape index: {}]
  %s10 = inlined_call_operand.vmem [shape: f32[32,1], index: 10, kind: input, shape index: {}]
  %s11 = inlined_call_operand.vmem [shape: f32[2,32,256], index: 11, kind: output, shape index: {}]
  %s12 = sld [smem:[#allocation0]]
  $region77: #{res_cbam_forward.1} parent=0
    _
  %s14 = ssub.s32 1, %s12
  %s15 = scalar_select 0, %s14, %s12
  %16 = sst [smem:[#allocation2]] %s8
  loop: start=0, step=1, limit=4
  $region2: #{res_cbam_forward.1} parent=0 // loop_pre_header
    _
  $region3: #{res_cbam_forward.1} parent=0 // loop_header
    %s18 = sphi 0, %s22
    %p19 = scmp.ge.s32.totalorder %s18, 4
    %s28 = sphi 0, %s30
    %s31 = sphi 0, %s28
    %s32 = sphi 0, %s31
    %s48 = sphi 0, %s32
    %s52 = sphi 0, %s52
    %s54 = sphi 0, %s52
    %s55 = sphi 0, %s54
    %s69 = sphi 0, %s55
    %s73 = sphi 0, %s73
    %s75 = sphi 0, %s73
    %s76 = sphi 0, %s75
    %s90 = sphi 0, %s76
    %s94 = sphi 0, %s94
    %s96 = sphi 0, %s94
    %s97 = sphi 0, %s96
    %s111 = sphi 0, %s97
    %s115 = sphi 0, %s115
    %s117 = sphi 0, %s115
    %s118 = sphi 0, %s117
    %s132 = sphi 0, %s118
    %s136 = sphi 0, %s136
    %s138 = sphi 0, %s136
    %s139 = sphi 0, %s138
    %s153 = sphi 0, %s139
    %s157 = sphi 0, %s157
    %s159 = sphi 0, %s157
    %s160 = sphi 0, %s159
    %s174 = sphi 0, %s160
    %s178 = sphi 0, %s178
    %s180 = sphi 0, %s178
    %s181 = sphi 0, %s180
    %s195 = sphi 0, %s181
    %s199 = sphi 0, %s199
    %s201 = sphi 0, %s199
    %s202 = sphi 0, %s201
    %s216 = sphi 0, %s202
    %s220 = sphi 0, %s220
    %s222 = sphi 0, %s220
    %s223 = sphi 0, %s222
    %s237 = sphi 0, %s223
    %s241 = sphi 0, %s241
    %s243 = sphi 0, %s241
    %s244 = sphi 0, %s243
    %s258 = sphi 0, %s244
    %s264 = sphi 0, %s266
    %s267 = sphi 0, %s264
    %s268 = sphi 0, %s267
    %s284 = sphi 0, %s268
  $region4: #{res_cbam_forward.1} parent=0 // loop_header_branch
    %21 = sbr.rel (%p19) target = $region8
  $region5: #{res_cbam_forward.1} parent=0 // loop_body
    %s23 = ssub.s32 %s18, 1
    %s24 = ssub.s32 %s18, 2
    %s25 = sadd.s32 %s18, 1
    %s26 = ssub.s32 %s18, %s25
    %p27 = scmp.eq.s32.totalorder %s26, 0
    %s29 = sadd.s32 %s28, 1
    %s30 = scalar_select %p27, %s28, %s29
    %p33 = pneg %p27
    %p34 = scmp.eq.s32.totalorder %s18, 1
    %p35 = por %p33, %p34
    %p36 = scmp.ne.s32.totalorder %s28, %s31
    %p37 = scmp.eq.s32.totalorder %s18, 0
    %p38 = por %p36, %p37
    %p39 = scmp.ne.s32.totalorder %s28, %s31
    %p40 = scmp.eq.s32.totalorder %s23, 1
    %p41 = por %p39, %p40
    %p42 = scmp.ne.s32.totalorder %s31, %s32
    %p43 = scmp.eq.s32.totalorder %s23, 0
    %p44 = por %p42, %p43
    %p45 = scmp.ne.s32.totalorder %s31, %s32
    %p46 = scmp.eq.s32.totalorder %s24, 1
    %p47 = por %p45, %p46
    %p49 = scmp.ne.s32.totalorder %s32, %s48
    %p50 = scmp.eq.s32.totalorder %s24, 0
    %p51 = por %p49, %p50
    %s53 = sadd.s32 %s52, 1
    %p56 = scmp.eq.s32.totalorder %s18, 1
    %p57 = scmp.ne.s32.totalorder %s52, %s54
    %p58 = scmp.eq.s32.totalorder %s18, 0
    %p59 = por %p57, %p58
    %p60 = scmp.ne.s32.totalorder %s52, %s54
    %p61 = scmp.eq.s32.totalorder %s23, 1
    %p62 = por %p60, %p61
    %p63 = scmp.ne.s32.totalorder %s54, %s55
    %p64 = scmp.eq.s32.totalorder %s23, 0
    %p65 = por %p63, %p64
    %p66 = scmp.ne.s32.totalorder %s54, %s55
    %p67 = scmp.eq.s32.totalorder %s24, 1
    %p68 = por %p66, %p67
    %p70 = scmp.ne.s32.totalorder %s55, %s69
    %p71 = scmp.eq.s32.totalorder %s24, 0
    %p72 = por %p70, %p71
    %s74 = sadd.s32 %s73, 1
    %p77 = scmp.eq.s32.totalorder %s18, 1
    %p78 = scmp.ne.s32.totalorder %s73, %s75
    %p79 = scmp.eq.s32.totalorder %s18, 0
    %p80 = por %p78, %p79
    %p81 = scmp.ne.s32.totalorder %s73, %s75
    %p82 = scmp.eq.s32.totalorder %s23, 1
    %p83 = por %p81, %p82
    %p84 = scmp.ne.s32.totalorder %s75, %s76
    %p85 = scmp.eq.s32.totalorder %s23, 0
    %p86 = por %p84, %p85
    %p87 = scmp.ne.s32.totalorder %s75, %s76
    %p88 = scmp.eq.s32.totalorder %s24, 1
    %p89 = por %p87, %p88
    %p91 = scmp.ne.s32.totalorder %s76, %s90
    %p92 = scmp.eq.s32.totalorder %s24, 0
    %p93 = por %p91, %p92
    %s95 = sadd.s32 %s94, 1
    %p98 = scmp.eq.s32.totalorder %s18, 1
    %p99 = scmp.ne.s32.totalorder %s94, %s96
    %p100 = scmp.eq.s32.totalorder %s18, 0
    %p101 = por %p99, %p100
    %p102 = scmp.ne.s32.totalorder %s94, %s96
    %p103 = scmp.eq.s32.totalorder %s23, 1
    %p104 = por %p102, %p103
    %p105 = scmp.ne.s32.totalorder %s96, %s97
    %p106 = scmp.eq.s32.totalorder %s23, 0
    %p107 = por %p105, %p106
    %p108 = scmp.ne.s32.totalorder %s96, %s97
    %p109 = scmp.eq.s32.totalorder %s24, 1
    %p110 = por %p108, %p109
    %p112 = scmp.ne.s32.totalorder %s97, %s111
    %p113 = scmp.eq.s32.totalorder %s24, 0
    %p114 = por %p112, %p113
    %s116 = sadd.s32 %s115, 1
    %p119 = scmp.eq.s32.totalorder %s18, 1
    %p120 = scmp.ne.s32.totalorder %s115, %s117
    %p121 = scmp.eq.s32.totalorder %s18, 0
    %p122 = por %p120, %p121
    %p123 = scmp.ne.s32.totalorder %s115, %s117
    %p124 = scmp.eq.s32.totalorder %s23, 1
    %p125 = por %p123, %p124
    %p126 = scmp.ne.s32.totalorder %s117, %s118
    %p127 = scmp.eq.s32.totalorder %s23, 0
    %p128 = por %p126, %p127
    %p129 = scmp.ne.s32.totalorder %s117, %s118
    %p130 = scmp.eq.s32.totalorder %s24, 1
    %p131 = por %p129, %p130
    %p133 = scmp.ne.s32.totalorder %s118, %s132
    %p134 = scmp.eq.s32.totalorder %s24, 0
    %p135 = por %p133, %p134
    %s137 = sadd.s32 %s136, 1
    %p140 = scmp.eq.s32.totalorder %s18, 1
    %p141 = scmp.ne.s32.totalorder %s136, %s138
    %p142 = scmp.eq.s32.totalorder %s18, 0
    %p143 = por %p141, %p142
    %p144 = scmp.ne.s32.totalorder %s136, %s138
    %p145 = scmp.eq.s32.totalorder %s23, 1
    %p146 = por %p144, %p145
    %p147 = scmp.ne.s32.totalorder %s138, %s139
    %p148 = scmp.eq.s32.totalorder %s23, 0
    %p149 = por %p147, %p148
    %p150 = scmp.ne.s32.totalorder %s138, %s139
    %p151 = scmp.eq.s32.totalorder %s24, 1
    %p152 = por %p150, %p151
    %p154 = scmp.ne.s32.totalorder %s139, %s153
    %p155 = scmp.eq.s32.totalorder %s24, 0
    %p156 = por %p154, %p155
    %s158 = sadd.s32 %s157, 1
    %p161 = scmp.eq.s32.totalorder %s18, 1
    %p162 = scmp.ne.s32.totalorder %s157, %s159
    %p163 = scmp.eq.s32.totalorder %s18, 0
    %p164 = por %p162, %p163
    %p165 = scmp.ne.s32.totalorder %s157, %s159
    %p166 = scmp.eq.s32.totalorder %s23, 1
    %p167 = por %p165, %p166
    %p168 = scmp.ne.s32.totalorder %s159, %s160
    %p169 = scmp.eq.s32.totalorder %s23, 0
    %p170 = por %p168, %p169
    %p171 = scmp.ne.s32.totalorder %s159, %s160
    %p172 = scmp.eq.s32.totalorder %s24, 1
    %p173 = por %p171, %p172
    %p175 = scmp.ne.s32.totalorder %s160, %s174
    %p176 = scmp.eq.s32.totalorder %s24, 0
    %p177 = por %p175, %p176
    %s179 = sadd.s32 %s178, 1
    %p182 = scmp.eq.s32.totalorder %s18, 1
    %p183 = scmp.ne.s32.totalorder %s178, %s180
    %p184 = scmp.eq.s32.totalorder %s18, 0
    %p185 = por %p183, %p184
    %p186 = scmp.ne.s32.totalorder %s178, %s180
    %p187 = scmp.eq.s32.totalorder %s23, 1
    %p188 = por %p186, %p187
    %p189 = scmp.ne.s32.totalorder %s180, %s181
    %p190 = scmp.eq.s32.totalorder %s23, 0
    %p191 = por %p189, %p190
    %p192 = scmp.ne.s32.totalorder %s180, %s181
    %p193 = scmp.eq.s32.totalorder %s24, 1
    %p194 = por %p192, %p193
    %p196 = scmp.ne.s32.totalorder %s181, %s195
    %p197 = scmp.eq.s32.totalorder %s24, 0
    %p198 = por %p196, %p197
    %s200 = sadd.s32 %s199, 1
    %p203 = scmp.eq.s32.totalorder %s18, 1
    %p204 = scmp.ne.s32.totalorder %s199, %s201
    %p205 = scmp.eq.s32.totalorder %s18, 0
    %p206 = por %p204, %p205
    %p207 = scmp.ne.s32.totalorder %s199, %s201
    %p208 = scmp.eq.s32.totalorder %s23, 1
    %p209 = por %p207, %p208
    %p210 = scmp.ne.s32.totalorder %s201, %s202
    %p211 = scmp.eq.s32.totalorder %s23, 0
    %p212 = por %p210, %p211
    %p213 = scmp.ne.s32.totalorder %s201, %s202
    %p214 = scmp.eq.s32.totalorder %s24, 1
    %p215 = por %p213, %p214
    %p217 = scmp.ne.s32.totalorder %s202, %s216
    %p218 = scmp.eq.s32.totalorder %s24, 0
    %p219 = por %p217, %p218
    %s221 = sadd.s32 %s220, 1
    %p224 = scmp.eq.s32.totalorder %s18, 1
    %p225 = scmp.ne.s32.totalorder %s220, %s222
    %p226 = scmp.eq.s32.totalorder %s18, 0
    %p227 = por %p225, %p226
    %p228 = scmp.ne.s32.totalorder %s220, %s222
    %p229 = scmp.eq.s32.totalorder %s23, 1
    %p230 = por %p228, %p229
    %p231 = scmp.ne.s32.totalorder %s222, %s223
    %p232 = scmp.eq.s32.totalorder %s23, 0
    %p233 = por %p231, %p232
    %p234 = scmp.ne.s32.totalorder %s222, %s223
    %p235 = scmp.eq.s32.totalorder %s24, 1
    %p236 = por %p234, %p235
    %p238 = scmp.ne.s32.totalorder %s223, %s237
    %p239 = scmp.eq.s32.totalorder %s24, 0
    %p240 = por %p238, %p239
    %s242 = sadd.s32 %s241, 1
    %p245 = scmp.eq.s32.totalorder %s18, 1
    %p246 = scmp.ne.s32.totalorder %s241, %s243
    %p247 = scmp.eq.s32.totalorder %s18, 0
    %p248 = por %p246, %p247
    %p249 = scmp.ne.s32.totalorder %s241, %s243
    %p250 = scmp.eq.s32.totalorder %s23, 1
    %p251 = por %p249, %p250
    %p252 = scmp.ne.s32.totalorder %s243, %s244
    %p253 = scmp.eq.s32.totalorder %s23, 0
    %p254 = por %p252, %p253
    %p255 = scmp.ne.s32.totalorder %s243, %s244
    %p256 = scmp.eq.s32.totalorder %s24, 1
    %p257 = por %p255, %p256
    %p259 = scmp.ne.s32.totalorder %s244, %s258
    %p260 = scmp.eq.s32.totalorder %s24, 0
    %p261 = por %p259, %p260
    %s262 = ssub.s32 %s18, %s25
    %p263 = scmp.eq.s32.totalorder %s262, 0
    %s265 = sadd.s32 %s264, 1
    %s266 = scalar_select %p263, %s264, %s265
    %p269 = pneg %p263
    %p270 = scmp.eq.s32.totalorder %s18, 1
    %p271 = por %p269, %p270
    %p272 = scmp.ne.s32.totalorder %s264, %s267
    %p273 = scmp.eq.s32.totalorder %s18, 0
    %p274 = por %p272, %p273
    %p275 = scmp.ne.s32.totalorder %s264, %s267
    %p276 = scmp.eq.s32.totalorder %s23, 1
    %p277 = por %p275, %p276
    %p278 = scmp.ne.s32.totalorder %s267, %s268
    %p279 = scmp.eq.s32.totalorder %s23, 0
    %p280 = por %p278, %p279
    %p281 = scmp.ne.s32.totalorder %s267, %s268
    %p282 = scmp.eq.s32.totalorder %s24, 1
    %p283 = por %p281, %p282
    %p285 = scmp.ne.s32.totalorder %s268, %s284
    %p286 = scmp.eq.s32.totalorder %s24, 0
    %p287 = por %p285, %p286
    %p288 = scmp.le.s32.totalorder 1, %s18
    %p289 = scmp.lt.s32.totalorder %s18, 3
    %p290 = pnand %p288, %p289
    %p291 = pneg %p290
    // Predicated region
    $region9: #{res_cbam_forward.1} parent=5 // pred_check
      _
    $region10: #{res_cbam_forward.1} parent=5 // pred_check_branch
      %293 = sbr.rel (%p290) target = $region12
    $region11: #{res_cbam_forward.1} parent=5 // pred_region
      %s294 = ssub.s32 %s18, 1
      // Predicated region
      $region13: #{res_cbam_forward.1} parent=11 // pred_check
        %p295 = pneg %p65
      $region14: #{res_cbam_forward.1} parent=11 // pred_check_branch
        %297 = sbr.rel (%p295) target = $region16
      $region15: #{res_cbam_forward.1} parent=11 // pred_region
        _
      $region16: #{res_cbam_forward.1} parent=11 // pred_fallthru
        _
      // Predicated region
      $region17: #{res_cbam_forward.1} parent=11 // pred_check
        %p298 = pneg %p86
      $region18: #{res_cbam_forward.1} parent=11 // pred_check_branch
        %300 = sbr.rel (%p298) target = $region20
      $region19: #{res_cbam_forward.1} parent=11 // pred_region
        _
      $region20: #{res_cbam_forward.1} parent=11 // pred_fallthru
        _
      // Predicated region
      $region21: #{res_cbam_forward.1} parent=11 // pred_check
        %p301 = pneg %p107
      $region22: #{res_cbam_forward.1} parent=11 // pred_check_branch
        %303 = sbr.rel (%p301) target = $region24
      $region23: #{res_cbam_forward.1} parent=11 // pred_region
        _
      $region24: #{res_cbam_forward.1} parent=11 // pred_fallthru
        _
      // Predicated region
      $region25: #{res_cbam_forward.1} parent=11 // pred_check
        %p304 = pneg %p128
      $region26: #{res_cbam_forward.1} parent=11 // pred_check_branch
        %306 = sbr.rel (%p304) target = $region28
      $region27: #{res_cbam_forward.1} parent=11 // pred_region
        _
      $region28: #{res_cbam_forward.1} parent=11 // pred_fallthru
        _
      // Predicated region
      $region29: #{res_cbam_forward.1} parent=11 // pred_check
        %p307 = pneg %p149
      $region30: #{res_cbam_forward.1} parent=11 // pred_check_branch
        %309 = sbr.rel (%p307) target = $region32
      $region31: #{res_cbam_forward.1} parent=11 // pred_region
        _
      $region32: #{res_cbam_forward.1} parent=11 // pred_fallthru
        _
      // Predicated region
      $region33: #{res_cbam_forward.1} parent=11 // pred_check
        %p310 = pneg %p170
      $region34: #{res_cbam_forward.1} parent=11 // pred_check_branch
        %312 = sbr.rel (%p310) target = $region36
      $region35: #{res_cbam_forward.1} parent=11 // pred_region
        _
      $region36: #{res_cbam_forward.1} parent=11 // pred_fallthru
        _
      // Predicated region
      $region37: #{res_cbam_forward.1} parent=11 // pred_check
        %p313 = pneg %p191
      $region38: #{res_cbam_forward.1} parent=11 // pred_check_branch
        %315 = sbr.rel (%p313) target = $region40
      $region39: #{res_cbam_forward.1} parent=11 // pred_region
        _
      $region40: #{res_cbam_forward.1} parent=11 // pred_fallthru
        _
      // Predicated region
      $region41: #{res_cbam_forward.1} parent=11 // pred_check
        %p316 = pneg %p212
      $region42: #{res_cbam_forward.1} parent=11 // pred_check_branch
        %318 = sbr.rel (%p316) target = $region44
      $region43: #{res_cbam_forward.1} parent=11 // pred_region
        _
      $region44: #{res_cbam_forward.1} parent=11 // pred_fallthru
        _
      // Predicated region
      $region45: #{res_cbam_forward.1} parent=11 // pred_check
        %p319 = pneg %p233
      $region46: #{res_cbam_forward.1} parent=11 // pred_check_branch
        %321 = sbr.rel (%p319) target = $region48
      $region47: #{res_cbam_forward.1} parent=11 // pred_region
        _
      $region48: #{res_cbam_forward.1} parent=11 // pred_fallthru
        _
      // Predicated region
      $region49: #{res_cbam_forward.1} parent=11 // pred_check
        %p322 = pneg %p254
      $region50: #{res_cbam_forward.1} parent=11 // pred_check_branch
        %324 = sbr.rel (%p322) target = $region52
      $region51: #{res_cbam_forward.1} parent=11 // pred_region
        _
      $region52: #{res_cbam_forward.1} parent=11 // pred_fallthru
        _
    $region12: #{res_cbam_forward.1} parent=5 // pred_fallthru
      _
    %p325 = scmp.lt.s32.totalorder %s18, 2
    // Predicated region
    $region53: #{res_cbam_forward.1} parent=5 // pred_check
      %p326 = pneg %p325
    $region54: #{res_cbam_forward.1} parent=5 // pred_check_branch
      %328 = sbr.rel (%p326) target = $region56
    $region55: #{res_cbam_forward.1} parent=5 // pred_region
      // Predicated region
      $region57: #{res_cbam_forward.1} parent=55 // pred_check
        %p329 = pneg %p38
      $region58: #{res_cbam_forward.1} parent=55 // pred_check_branch
        %331 = sbr.rel (%p329) target = $region60
      $region59: #{res_cbam_forward.1} parent=55 // pred_region
        %p332 = scmp.lt.s32.totalorder %s18, 1
        %s333 = scalar_select %p332, %s18, 1
        %s334 = smul.addr %s333, 8
        %s335 = smul.addr %s334, 8
        %s336 = scalar_lea.vmem %s0, %s335
      $region60: #{res_cbam_forward.1} parent=55 // pred_fallthru
        _
    $region56: #{res_cbam_forward.1} parent=5 // pred_fallthru
      _
    %p337 = scmp.le.s32.totalorder 1, %s18
    %p338 = scmp.lt.s32.totalorder %s18, 3
    %p339 = pnand %p337, %p338
    %p340 = pneg %p339
    // Predicated region
    $region61: #{res_cbam_forward.1} parent=5 // pred_check
      _
    $region62: #{res_cbam_forward.1} parent=5 // pred_check_branch
      %342 = sbr.rel (%p339) target = $region64
    $region63: #{res_cbam_forward.1} parent=5 // pred_region
      %s343 = ssub.s32 %s18, 1
      %p344 = scmp.lt.s32.totalorder %s23, 1
      %s345 = scalar_select %p344, %s23, 1
      %s346 = smul.addr %s345, 8
      %s347 = smul.addr %s346, 8
      %s348 = scalar_lea.vmem %s0, %s347
      %p349 = pneg %p44
      %p350 = pneg %p41
      %p351 = pneg %p65
      %p352 = pneg %p62
      %p353 = pneg %p86
      %p354 = pneg %p83
      %p355 = pneg %p107
      %p356 = pneg %p104
      %p357 = pneg %p128
      %p358 = pneg %p125
      %p359 = pneg %p149
      %p360 = pneg %p146
      %p361 = pneg %p170
      %p362 = pneg %p167
      %p363 = pneg %p191
      %p364 = pneg %p188
      %p365 = pneg %p212
      %p366 = pneg %p209
      %p367 = pneg %p233
      %p368 = pneg %p230
      %p369 = pneg %p254
      %p370 = pneg %p251
      %p371 = pneg %p280
      %p372 = pneg %p277
      %p373 = scmp.lt.s32.totalorder %s23, 1
      %s374 = scalar_select %p373, %s23, 1
      %s375 = smul.addr %s374, 8
      %s376 = smul.addr %s375, 8
      %s377 = scalar_lea.vmem %s11, %s376
      %p378 = scmp.lt.s32.totalorder %s23, 1
      %s379 = scalar_select %p378, %s23, 1
      %s380 = smul.addr %s379, 8
      %s381 = smul.addr %s380, 8
      %s382 = scalar_lea.vmem %s0, %s381
      %p383 = scmp.lt.s32.totalorder %s23, 1
      %s384 = scalar_select %p383, %s23, 1
      %s385 = smul.addr %s384, 8
      %s386 = smul.addr %s385, 8
      %s387 = scalar_lea.vmem %s11, %s386
      %v388 = vld [vmem:[%s382] sm:$0xff]
      %v389 = vld [vmem:[%s382 + $0x8] sm:$0xff]
      %v390 = vld [vmem:[%s382 + $0x10] sm:$0xff]
      %v391 = vld [vmem:[%s382 + $0x18] sm:$0xff]
      %v392 = vld [vmem:[%s382 + $0x20] sm:$0xff]
      %v393 = vld [vmem:[%s382 + $0x28] sm:$0xff]
      %v394 = vld [vmem:[%s382 + $0x30] sm:$0xff]
      %v395 = vld [vmem:[%s382 + $0x38] sm:$0xff]
      %v396 = vld [vmem:[%s1] sm:$0xff]
      %v397 = vld [vmem:[%s1 + $0x8] sm:$0xff]
      %v398 = vld [vmem:[%s1 + $0x10] sm:$0xff]
      %v399 = vld [vmem:[%s1 + $0x18] sm:$0xff]
      %v400 = vld [vmem:[%s1 + $0x20] sm:$0xff]
      %v401 = vld [vmem:[%s1 + $0x28] sm:$0xff]
      %v402 = vld [vmem:[%s1 + $0x30] sm:$0xff]
      %v403 = vld [vmem:[%s1 + $0x38] sm:$0xff]
      %v404 = vld [vmem:[%s1 + $0x40] sm:$0xff]
      %v405 = vld [vmem:[%s1 + $0x48] sm:$0xff]
      %v406 = vld [vmem:[%s1 + $0x50] sm:$0xff]
      %v407 = vld [vmem:[%s1 + $0x58] sm:$0xff]
      %v408 = vld [vmem:[%s1 + $0x60] sm:$0xff]
      %v409 = vld [vmem:[%s1 + $0x68] sm:$0xff]
      %v410 = vld [vmem:[%s1 + $0x70] sm:$0xff]
      %v411 = vld [vmem:[%s1 + $0x78] sm:$0xff]
      %v412 = vld [vmem:[%s1 + $0x80] sm:$0xff]
      %v413 = vld [vmem:[%s1 + $0x88] sm:$0xff]
      %v414 = vld [vmem:[%s1 + $0x90] sm:$0xff]
      %v415 = vld [vmem:[%s1 + $0x98] sm:$0xff]
      %v416 = vld [vmem:[%s1 + $0xa0] sm:$0xff]
      %v417 = vld [vmem:[%s1 + $0xa8] sm:$0xff]
      %v418 = vld [vmem:[%s1 + $0xb0] sm:$0xff]
      %v419 = vld [vmem:[%s1 + $0xb8] sm:$0xff]
      %v420 = vld [vmem:[%s1 + $0xc0] sm:$0xff]
      %v421 = vld [vmem:[%s1 + $0xc8] sm:$0xff]
      %v422 = vld [vmem:[%s1 + $0xd0] sm:$0xff]
      %v423 = vld [vmem:[%s1 + $0xd8] sm:$0xff]
      %v424 = vld [vmem:[%s1 + $0xe0] sm:$0xff]
      %v425 = vld [vmem:[%s1 + $0xe8] sm:$0xff]
      %v426 = vld [vmem:[%s1 + $0xf0] sm:$0xff]
      %v427 = vld [vmem:[%s1 + $0xf8] sm:$0xff]
      %v428 = vld [vmem:[%s1 + $0x100] sm:$0xff]
      %v429 = vld [vmem:[%s1 + $0x108] sm:$0xff]
      %v430 = vld [vmem:[%s1 + $0x110] sm:$0xff]
      %v431 = vld [vmem:[%s1 + $0x118] sm:$0xff]
      %v432 = vld [vmem:[%s1 + $0x120] sm:$0xff]
      %v433 = vld [vmem:[%s1 + $0x128] sm:$0xff]
      %v434 = vld [vmem:[%s1 + $0x130] sm:$0xff]
      %v435 = vld [vmem:[%s1 + $0x138] sm:$0xff]
      %v436 = vld [vmem:[%s1 + $0x140] sm:$0xff]
      %v437 = vld [vmem:[%s1 + $0x148] sm:$0xff]
      %v438 = vld [vmem:[%s1 + $0x150] sm:$0xff]
      %v439 = vld [vmem:[%s1 + $0x158] sm:$0xff]
      %v440 = vld [vmem:[%s1 + $0x160] sm:$0xff]
      %v441 = vld [vmem:[%s1 + $0x168] sm:$0xff]
      %v442 = vld [vmem:[%s1 + $0x170] sm:$0xff]
      %v443 = vld [vmem:[%s1 + $0x178] sm:$0xff]
      %v444 = vld [vmem:[%s1 + $0x180] sm:$0xff]
      %v445 = vld [vmem:[%s1 + $0x188] sm:$0xff]
      %v446 = vld [vmem:[%s1 + $0x190] sm:$0xff]
      %v447 = vld [vmem:[%s1 + $0x198] sm:$0xff]
      %v448 = vld [vmem:[%s1 + $0x1a0] sm:$0xff]
      %v449 = vld [vmem:[%s1 + $0x1a8] sm:$0xff]
      %v450 = vld [vmem:[%s1 + $0x1b0] sm:$0xff]
      %v451 = vld [vmem:[%s1 + $0x1b8] sm:$0xff]
      %v452 = vld [vmem:[%s1 + $0x1c0] sm:$0xff]
      %v453 = vld [vmem:[%s1 + $0x1c8] sm:$0xff]
      %v454 = vld [vmem:[%s1 + $0x1d0] sm:$0xff]
      %v455 = vld [vmem:[%s1 + $0x1d8] sm:$0xff]
      %v456 = vld [vmem:[%s1 + $0x1e0] sm:$0xff]
      %v457 = vld [vmem:[%s1 + $0x1e8] sm:$0xff]
      %v458 = vld [vmem:[%s1 + $0x1f0] sm:$0xff]
      %v459 = vld [vmem:[%s1 + $0x1f8] sm:$0xff]
      %460 = vmatprep.subr.mxu0 %v397
      %461 = vmatpush1.msra.mxu0 %v396
      %462 = vmatprep.subr.mxu0 %v399
      %463 = vmatpush1.msra.mxu0 %v398
      %464 = vmatprep.subr.mxu0 %v401
      %465 = vmatpush1.msra.mxu0 %v400
      %466 = vmatprep.subr.mxu0 %v403
      %467 = vmatpush1.msra.mxu0 %v402
      %468 = vmatprep.subr.mxu0 %v405
      %469 = vmatpush1.msra.mxu0 %v404
      %470 = vmatprep.subr.mxu0 %v407
      %471 = vmatpush1.msra.mxu0 %v406
      %472 = vmatprep.subr.mxu0 %v409
      %473 = vmatpush1.msra.mxu0 %v408
      %474 = vmatprep.subr.mxu0 %v411
      %475 = vmatpush1.msra.mxu0 %v410
      %476 = vmatprep.subr.mxu0 %v413
      %477 = vmatpush1.msra.mxu0 %v412
      %478 = vmatprep.subr.mxu0 %v415
      %479 = vmatpush1.msra.mxu0 %v414
      %480 = vmatprep.subr.mxu0 %v417
      %481 = vmatpush1.msra.mxu0 %v416
      %482 = vmatprep.subr.mxu0 %v419
      %483 = vmatpush1.msra.mxu0 %v418
      %484 = vmatprep.subr.mxu0 %v421
      %485 = vmatpush1.msra.mxu0 %v420
      %486 = vmatprep.subr.mxu0 %v423
      %487 = vmatpush1.msra.mxu0 %v422
      %488 = vmatprep.subr.mxu0 %v425
      %489 = vmatpush1.msra.mxu0 %v424
      %490 = vmatprep.subr.mxu0 %v427
      %491 = vmatpush1.msra.mxu0 %v426
      %492 = vmatprep.subr.mxu0 %v429
      %493 = vmatpush1.msra.mxu0 %v428
      %494 = vmatprep.subr.mxu0 %v431
      %495 = vmatpush1.msra.mxu0 %v430
      %496 = vmatprep.subr.mxu0 %v433
      %497 = vmatpush1.msra.mxu0 %v432
      %498 = vmatprep.subr.mxu0 %v435
      %499 = vmatpush1.msra.mxu0 %v434
      %500 = vmatprep.subr.mxu0 %v437
      %501 = vmatpush1.msra.mxu0 %v436
      %502 = vmatprep.subr.mxu0 %v439
      %503 = vmatpush1.msra.mxu0 %v438
      %504 = vmatprep.subr.mxu0 %v441
      %505 = vmatpush1.msra.mxu0 %v440
      %506 = vmatprep.subr.mxu0 %v443
      %507 = vmatpush1.msra.mxu0 %v442
      %508 = vmatprep.subr.mxu0 %v445
      %509 = vmatpush1.msra.mxu0 %v444
      %510 = vmatprep.subr.mxu0 %v447
      %511 = vmatpush1.msra.mxu0 %v446
      %512 = vmatprep.subr.mxu0 %v449
      %513 = vmatpush1.msra.mxu0 %v448
      %514 = vmatprep.subr.mxu0 %v451
      %515 = vmatpush1.msra.mxu0 %v450
      %516 = vmatprep.subr.mxu0 %v453
      %517 = vmatpush1.msra.mxu0 %v452
      %518 = vmatprep.subr.mxu0 %v455
      %519 = vmatpush1.msra.mxu0 %v454
      %520 = vmatprep.subr.mxu0 %v457
      %521 = vmatpush1.msra.mxu0 %v456
      %522 = vmatprep.subr.mxu0 %v459
      %523 = vmatpush1.msra.mxu0 %v458
      %524 = vmatprep.mubr.f32.mxu0 %v389
      %525 = vmatmul.mubr.f32.gmra.mrb[0].mxu0 %v388
      %v526 = vpop.f32.mrb[0].mxu0
      %v527 = vadd.f32 0.0, %v526
      %v528 = vpop.f32.mrb[0].mxu0
      %v529 = vadd.f32 0.0, %v528
      %530 = vmatprep.mubr.f32.mxu0 %v391
      %531 = vmatmul.mubr.f32.gmra.mrb[0].mxu0 %v390
      %v532 = vpop.f32.mrb[0].mxu0
      %v533 = vadd.f32 0.0, %v532
      %v534 = vpop.f32.mrb[0].mxu0
      %v535 = vadd.f32 0.0, %v534
      %536 = vmatprep.mubr.f32.mxu0 %v393
      %537 = vmatmul.mubr.f32.gmra.mrb[0].mxu0 %v392
      %v538 = vpop.f32.mrb[0].mxu0
      %v539 = vadd.f32 0.0, %v538
      %v540 = vpop.f32.mrb[0].mxu0
      %v541 = vadd.f32 0.0, %v540
      %542 = vmatprep.mubr.f32.mxu0 %v395
      %543 = vmatmul.mubr.f32.gmra.mrb[0].mxu0 %v394
      %v544 = vpop.f32.mrb[0].mxu0
      %v545 = vadd.f32 0.0, %v544
      %v546 = vpop.f32.mrb[0].mxu0
      %v547 = vadd.f32 0.0, %v546
      %548 = vdwg.mxu0
      %v549 = vsub.f32 %v388, %v527
      %v550 = vsub.f32 %v389, %v529
      %v551 = vsub.f32 %v390, %v533
      %v552 = vsub.f32 %v391, %v535
      %v553 = vsub.f32 %v392, %v539
      %v554 = vsub.f32 %v393, %v541
      %v555 = vsub.f32 %v394, %v545
      %v556 = vsub.f32 %v395, %v547
      %v557 = vadd.f32 %v549, %v550
      %558 = vadd.xlane.f32.xlu0 %v557
      %v559 = vpop.xlane.xlu0 %558
      %v560 = vadd.f32 %v551, %v552
      %561 = vadd.xlane.f32.xlu0 %v560
      %v562 = vpop.xlane.xlu0 %561
      %v563 = vadd.f32 %v553, %v554
      %564 = vadd.xlane.f32.xlu0 %v563
      %v565 = vpop.xlane.xlu0 %564
      %v566 = vadd.f32 %v555, %v556
      %567 = vadd.xlane.f32.xlu0 %v566
      %v568 = vpop.xlane.xlu0 %567
      %v569 = vmul.f32 %v559, 0.00390625
      %v570 = vmul.f32 %v562, 0.00390625
      %v571 = vmul.f32 %v565, 0.00390625
      %v572 = vmul.f32 %v568, 0.00390625
      %v573 = vmax.f32 %v549, %v550
      %574 = vmax.xlane.f32.xlu0 %v573
      %v575 = vpop.xlane.xlu0 %574
      %v576 = vmax.f32 %v551, %v552
      %577 = vmax.xlane.f32.xlu0 %v576
      %v578 = vpop.xlane.xlu0 %577
      %v579 = vmax.f32 %v553, %v554
      %580 = vmax.xlane.f32.xlu0 %v579
      %v581 = vpop.xlane.xlu0 %580
      %v582 = vmax.f32 %v555, %v556
      %583 = vmax.xlane.f32.xlu0 %v582
      %v584 = vpop.xlane.xlu0 %583
      %v585 = vld [vmem:[%s2] sm:$0x3]
      %v586 = vld [vmem:[%s3] sm:$0x3]
      %v587 = vld [vmem:[%s4] sm:$0xff]
      %v588 = vld [vmem:[%s4 + $0x8] sm:$0xff]
      %v589 = vld [vmem:[%s4 + $0x10] sm:$0xff]
      %v590 = vld [vmem:[%s4 + $0x18] sm:$0xff]
      %v591 = vld [vmem:[%s5] sm:$0xff]
      %v592 = vld [vmem:[%s5 + $0x8] sm:$0xff]
      %v593 = vld [vmem:[%s5 + $0x10] sm:$0xff]
      %v594 = vld [vmem:[%s5 + $0x18] sm:$0xff]
      %vm595 = vcmask 261120
      %v597 = vsel %vm595, %v585, 0
      %599 = vmatprep.subr.mxu0 0.0
      %600 = vmatpush1.msra.mxu0 %v569
      %601 = vmatprep.subr.mxu0 0.0
      %602 = vmatpush1.msra.mxu0 %v570
      %603 = vmatprep.subr.mxu0 0.0
      %604 = vmatpush1.msra.mxu0 %v571
      %605 = vmatprep.subr.mxu0 0.0
      %606 = vmatpush1.msra.mxu0 %v572
      %607 = vmatprep.subr.mxu0 0.0
      %608 = vmatpush1.msra.mxu0 0.0
      %609 = vmatprep.subr.mxu0 0.0
      %610 = vmatpush1.msra.mxu0 0.0
      %611 = vmatprep.subr.mxu0 0.0
      %612 = vmatpush1.msra.mxu0 0.0
      %613 = vmatprep.subr.mxu0 0.0
      %614 = vmatpush1.msra.mxu0 0.0
      %615 = vmatprep.subr.mxu0 0.0
      %616 = vmatpush1.msra.mxu0 0.0
      %617 = vmatprep.subr.mxu0 0.0
      %618 = vmatpush1.msra.mxu0 0.0
      %619 = vmatprep.subr.mxu0 0.0
      %620 = vmatpush1.msra.mxu0 0.0
      %621 = vmatprep.subr.mxu0 0.0
      %622 = vmatpush1.msra.mxu0 0.0
      %623 = vmatprep.subr.mxu0 0.0
      %624 = vmatpush1.msra.mxu0 0.0
      %625 = vmatprep.subr.mxu0 0.0
      %626 = vmatpush1.msra.mxu0 0.0
      %627 = vmatprep.subr.mxu0 0.0
      %628 = vmatpush1.msra.mxu0 0.0
      %629 = vmatprep.subr.mxu0 0.0
      %630 = vmatpush1.msra.mxu0 0.0
      %631 = vmatprep.subr.mxu0 0.0
      %632 = vmatpush1.msra.mxu0 0.0
      %633 = vmatprep.subr.mxu0 0.0
      %634 = vmatpush1.msra.mxu0 0.0
      %635 = vmatprep.subr.mxu0 0.0
      %636 = vmatpush1.msra.mxu0 0.0
      %637 = vmatprep.subr.mxu0 0.0
      %638 = vmatpush1.msra.mxu0 0.0
      %639 = vmatprep.subr.mxu0 0.0
      %640 = vmatpush1.msra.mxu0 0.0
      %641 = vmatprep.subr.mxu0 0.0
      %642 = vmatpush1.msra.mxu0 0.0
      %643 = vmatprep.subr.mxu0 0.0
      %644 = vmatpush1.msra.mxu0 0.0
      %645 = vmatprep.subr.mxu0 0.0
      %646 = vmatpush1.msra.mxu0 0.0
      %647 = vmatprep.subr.mxu0 0.0
      %648 = vmatpush1.msra.mxu0 0.0
      %649 = vmatprep.subr.mxu0 0.0
      %650 = vmatpush1.msra.mxu0 0.0
      %651 = vmatprep.subr.mxu0 0.0
      %652 = vmatpush1.msra.mxu0 0.0
      %653 = vmatprep.subr.mxu0 0.0
      %654 = vmatpush1.msra.mxu0 0.0
      %655 = vmatprep.subr.mxu0 0.0
      %656 = vmatpush1.msra.mxu0 0.0
      %657 = vmatprep.subr.mxu0 0.0
      %658 = vmatpush1.msra.mxu0 0.0
      %659 = vmatprep.subr.mxu0 0.0
      %660 = vmatpush1.msra.mxu0 0.0
      %661 = vmatprep.subr.mxu0 0.0
      %662 = vmatpush1.msra.mxu0 0.0
      %663 = vmatprep.mubr.f32.mxu0 0.0
      %664 = vmatmul.mubr.f32.gmra.mrb[0].mxu0 %v597
      %v665 = vpop.f32.mrb[0].mxu0
      %v666 = vadd.f32 %v586, %v665
      %v667 = vpop.f32.mrb[0].mxu0
      %668 = vdwg.mxu0
      %v669 = vmax.f32 %v666, 0.0
      %vm670 = vcmask 15360
      %v672 = vsel %vm670, %v587, 0
      %v675 = vsel %vm670, %v588, 0
      %v678 = vsel %vm670, %v589, 0
      %v681 = vsel %vm670, %v590, 0
      %vm683 = vcmask 1041408
      %v685 = vsel %vm683, %v669, 0
      %687 = vmatprep.subr.mxu0 0.0
      %688 = vmatpush1.msra.mxu0 %v685
      %689 = vmatprep.subr.mxu0 0.0
      %690 = vmatpush1.msra.mxu0 0.0
      %691 = vmatprep.subr.mxu0 0.0
      %692 = vmatpush1.msra.mxu0 0.0
      %693 = vmatprep.subr.mxu0 0.0
      %694 = vmatpush1.msra.mxu0 0.0
      %695 = vmatprep.subr.mxu0 0.0
      %696 = vmatpush1.msra.mxu0 0.0
      %697 = vmatprep.subr.mxu0 0.0
      %698 = vmatpush1.msra.mxu0 0.0
      %699 = vmatprep.subr.mxu0 0.0
      %700 = vmatpush1.msra.mxu0 0.0
      %701 = vmatprep.subr.mxu0 0.0
      %702 = vmatpush1.msra.mxu0 0.0
      %703 = vmatprep.subr.mxu0 0.0
      %704 = vmatpush1.msra.mxu0 0.0
      %705 = vmatprep.subr.mxu0 0.0
      %706 = vmatpush1.msra.mxu0 0.0
      %707 = vmatprep.subr.mxu0 0.0
      %708 = vmatpush1.msra.mxu0 0.0
      %709 = vmatprep.subr.mxu0 0.0
      %710 = vmatpush1.msra.mxu0 0.0
      %711 = vmatprep.subr.mxu0 0.0
      %712 = vmatpush1.msra.mxu0 0.0
      %713 = vmatprep.subr.mxu0 0.0
      %714 = vmatpush1.msra.mxu0 0.0
      %715 = vmatprep.subr.mxu0 0.0
      %716 = vmatpush1.msra.mxu0 0.0
      %717 = vmatprep.subr.mxu0 0.0
      %718 = vmatpush1.msra.mxu0 0.0
      %719 = vmatprep.subr.mxu0 0.0
      %720 = vmatpush1.msra.mxu0 0.0
      %721 = vmatprep.subr.mxu0 0.0
      %722 = vmatpush1.msra.mxu0 0.0
      %723 = vmatprep.subr.mxu0 0.0
      %724 = vmatpush1.msra.mxu0 0.0
      %725 = vmatprep.subr.mxu0 0.0
      %726 = vmatpush1.msra.mxu0 0.0
      %727 = vmatprep.subr.mxu0 0.0
      %728 = vmatpush1.msra.mxu0 0.0
      %729 = vmatprep.subr.mxu0 0.0
      %730 = vmatpush1.msra.mxu0 0.0
      %731 = vmatprep.subr.mxu0 0.0
      %732 = vmatpush1.msra.mxu0 0.0
      %733 = vmatprep.subr.mxu0 0.0
      %734 = vmatpush1.msra.mxu0 0.0
      %735 = vmatprep.subr.mxu0 0.0
      %736 = vmatpush1.msra.mxu0 0.0
      %737 = vmatprep.subr.mxu0 0.0
      %738 = vmatpush1.msra.mxu0 0.0
      %739 = vmatprep.subr.mxu0 0.0
      %740 = vmatpush1.msra.mxu0 0.0
      %741 = vmatprep.subr.mxu0 0.0
      %742 = vmatpush1.msra.mxu0 0.0
      %743 = vmatprep.subr.mxu0 0.0
      %744 = vmatpush1.msra.mxu0 0.0
      %745 = vmatprep.subr.mxu0 0.0
      %746 = vmatpush1.msra.mxu0 0.0
      %747 = vmatprep.subr.mxu0 0.0
      %748 = vmatpush1.msra.mxu0 0.0
      %749 = vmatprep.subr.mxu0 0.0
      %750 = vmatpush1.msra.mxu0 0.0
      %751 = vmatprep.mubr.f32.mxu0 0.0
      %752 = vmatmul.mubr.f32.gmra.mrb[0].mxu0 %v672
      %v753 = vpop.f32.mrb[0].mxu0
      %v754 = vadd.f32 %v591, %v753
      %v755 = vpop.f32.mrb[0].mxu0
      %756 = vmatprep.mubr.f32.mxu0 0.0
      %757 = vmatmul.mubr.f32.gmra.mrb[0].mxu0 %v675
      %v758 = vpop.f32.mrb[0].mxu0
      %v759 = vadd.f32 %v592, %v758
      %v760 = vpop.f32.mrb[0].mxu0
      %761 = vmatprep.mubr.f32.mxu0 0.0
      %762 = vmatmul.mubr.f32.gmra.mrb[0].mxu0 %v678
      %v763 = vpop.f32.mrb[0].mxu0
      %v764 = vadd.f32 %v593, %v763
      %v765 = vpop.f32.mrb[0].mxu0
      %766 = vmatprep.mubr.f32.mxu0 0.0
      %767 = vmatmul.mubr.f32.gmra.mrb[0].mxu0 %v681
      %v768 = vpop.f32.mrb[0].mxu0
      %v769 = vadd.f32 %v594, %v768
      %v770 = vpop.f32.mrb[0].mxu0
      %771 = vdwg.mxu0
      %772 = vmatprep.subr.mxu0 0.0
      %773 = vmatpush1.msra.mxu0 %v575
      %774 = vmatprep.subr.mxu0 0.0
      %775 = vmatpush1.msra.mxu0 %v578
      %776 = vmatprep.subr.mxu0 0.0
      %777 = vmatpush1.msra.mxu0 %v581
      %778 = vmatprep.subr.mxu0 0.0
      %779 = vmatpush1.msra.mxu0 %v584
      %780 = vmatprep.subr.mxu0 0.0
      %781 = vmatpush1.msra.mxu0 0.0
      %782 = vmatprep.subr.mxu0 0.0
      %783 = vmatpush1.msra.mxu0 0.0
      %784 = vmatprep.subr.mxu0 0.0
      %785 = vmatpush1.msra.mxu0 0.0
      %786 = vmatprep.subr.mxu0 0.0
      %787 = vmatpush1.msra.mxu0 0.0
      %788 = vmatprep.subr.mxu0 0.0
      %789 = vmatpush1.msra.mxu0 0.0
      %790 = vmatprep.subr.mxu0 0.0
      %791 = vmatpush1.msra.mxu0 0.0
      %792 = vmatprep.subr.mxu0 0.0
      %793 = vmatpush1.msra.mxu0 0.0
      %794 = vmatprep.subr.mxu0 0.0
      %795 = vmatpush1.msra.mxu0 0.0
      %796 = vmatprep.subr.mxu0 0.0
      %797 = vmatpush1.msra.mxu0 0.0
      %798 = vmatprep.subr.mxu0 0.0
      %799 = vmatpush1.msra.mxu0 0.0
      %800 = vmatprep.subr.mxu0 0.0
      %801 = vmatpush1.msra.mxu0 0.0
      %802 = vmatprep.subr.mxu0 0.0
      %803 = vmatpush1.msra.mxu0 0.0
      %804 = vmatprep.subr.mxu0 0.0
      %805 = vmatpush1.msra.mxu0 0.0
      %806 = vmatprep.subr.mxu0 0.0
      %807 = vmatpush1.msra.mxu0 0.0
      %808 = vmatprep.subr.mxu0 0.0
      %809 = vmatpush1.msra.mxu0 0.0
      %810 = vmatprep.subr.mxu0 0.0
      %811 = vmatpush1.msra.mxu0 0.0
      %812 = vmatprep.subr.mxu0 0.0
      %813 = vmatpush1.msra.mxu0 0.0
      %814 = vmatprep.subr.mxu0 0.0
      %815 = vmatpush1.msra.mxu0 0.0
      %816 = vmatprep.subr.mxu0 0.0
      %817 = vmatpush1.msra.mxu0 0.0
      %818 = vmatprep.subr.mxu0 0.0
      %819 = vmatpush1.msra.mxu0 0.0
      %820 = vmatprep.subr.mxu0 0.0
      %821 = vmatpush1.msra.mxu0 0.0
      %822 = vmatprep.subr.mxu0 0.0
      %823 = vmatpush1.msra.mxu0 0.0
      %824 = vmatprep.subr.mxu0 0.0
      %825 = vmatpush1.msra.mxu0 0.0
      %826 = vmatprep.subr.mxu0 0.0
      %827 = vmatpush1.msra.mxu0 0.0
      %828 = vmatprep.subr.mxu0 0.0
      %829 = vmatpush1.msra.mxu0 0.0
      %830 = vmatprep.subr.mxu0 0.0
      %831 = vmatpush1.msra.mxu0 0.0
      %832 = vmatprep.subr.mxu0 0.0
      %833 = vmatpush1.msra.mxu0 0.0
      %834 = vmatprep.subr.mxu0 0.0
      %835 = vmatpush1.msra.mxu0 0.0
      %836 = vmatprep.mubr.f32.mxu0 0.0
      %837 = vmatmul.mubr.f32.gmra.mrb[0].mxu0 %v597
      %v838 = vpop.f32.mrb[0].mxu0
      %v839 = vadd.f32 %v586, %v838
      %v840 = vpop.f32.mrb[0].mxu0
      %841 = vdwg.mxu0
      %v842 = vmax.f32 %v839, 0.0
      %v844 = vsel %vm683, %v842, 0
      %846 = vmatprep.subr.mxu0 0.0
      %847 = vmatpush1.msra.mxu0 %v844
      %848 = vmatprep.subr.mxu0 0.0
      %849 = vmatpush1.msra.mxu0 0.0
      %850 = vmatprep.subr.mxu0 0.0
      %851 = vmatpush1.msra.mxu0 0.0
      %852 = vmatprep.subr.mxu0 0.0
      %853 = vmatpush1.msra.mxu0 0.0
      %854 = vmatprep.subr.mxu0 0.0
      %855 = vmatpush1.msra.mxu0 0.0
      %856 = vmatprep.subr.mxu0 0.0
      %857 = vmatpush1.msra.mxu0 0.0
      %858 = vmatprep.subr.mxu0 0.0
      %859 = vmatpush1.msra.mxu0 0.0
      %860 = vmatprep.subr.mxu0 0.0
      %861 = vmatpush1.msra.mxu0 0.0
      %862 = vmatprep.subr.mxu0 0.0
      %863 = vmatpush1.msra.mxu0 0.0
      %864 = vmatprep.subr.mxu0 0.0
      %865 = vmatpush1.msra.mxu0 0.0
      %866 = vmatprep.subr.mxu0 0.0
      %867 = vmatpush1.msra.mxu0 0.0
      %868 = vmatprep.subr.mxu0 0.0
      %869 = vmatpush1.msra.mxu0 0.0
      %870 = vmatprep.subr.mxu0 0.0
      %871 = vmatpush1.msra.mxu0 0.0
      %872 = vmatprep.subr.mxu0 0.0
      %873 = vmatpush1.msra.mxu0 0.0
      %874 = vmatprep.subr.mxu0 0.0
      %875 = vmatpush1.msra.mxu0 0.0
      %876 = vmatprep.subr.mxu0 0.0
      %877 = vmatpush1.msra.mxu0 0.0
      %878 = vmatprep.subr.mxu0 0.0
      %879 = vmatpush1.msra.mxu0 0.0
      %880 = vmatprep.subr.mxu0 0.0
      %881 = vmatpush1.msra.mxu0 0.0
      %882 = vmatprep.subr.mxu0 0.0
      %883 = vmatpush1.msra.mxu0 0.0
      %884 = vmatprep.subr.mxu0 0.0
      %885 = vmatpush1.msra.mxu0 0.0
      %886 = vmatprep.subr.mxu0 0.0
      %887 = vmatpush1.msra.mxu0 0.0
      %888 = vmatprep.subr.mxu0 0.0
      %889 = vmatpush1.msra.mxu0 0.0
      %890 = vmatprep.subr.mxu0 0.0
      %891 = vmatpush1.msra.mxu0 0.0
      %892 = vmatprep.subr.mxu0 0.0
      %893 = vmatpush1.msra.mxu0 0.0
      %894 = vmatprep.subr.mxu0 0.0
      %895 = vmatpush1.msra.mxu0 0.0
      %896 = vmatprep.subr.mxu0 0.0
      %897 = vmatpush1.msra.mxu0 0.0
      %898 = vmatprep.subr.mxu0 0.0
      %899 = vmatpush1.msra.mxu0 0.0
      %900 = vmatprep.subr.mxu0 0.0
      %901 = vmatpush1.msra.mxu0 0.0
      %902 = vmatprep.subr.mxu0 0.0
      %903 = vmatpush1.msra.mxu0 0.0
      %904 = vmatprep.subr.mxu0 0.0
      %905 = vmatpush1.msra.mxu0 0.0
      %906 = vmatprep.subr.mxu0 0.0
      %907 = vmatpush1.msra.mxu0 0.0
      %908 = vmatprep.subr.mxu0 0.0
      %909 = vmatpush1.msra.mxu0 0.0
      %910 = vmatprep.mubr.f32.mxu0 0.0
      %911 = vmatmul.mubr.f32.gmra.mrb[0].mxu0 %v672
      %v912 = vpop.f32.mrb[0].mxu0
      %v913 = vadd.f32 %v591, %v912
      %v914 = vpop.f32.mrb[0].mxu0
      %915 = vmatprep.mubr.f32.mxu0 0.0
      %916 = vmatmul.mubr.f32.gmra.mrb[0].mxu0 %v675
      %v917 = vpop.f32.mrb[0].mxu0
      %v918 = vadd.f32 %v592, %v917
      %v919 = vpop.f32.mrb[0].mxu0
      %920 = vmatprep.mubr.f32.mxu0 0.0
      %921 = vmatmul.mubr.f32.gmra.mrb[0].mxu0 %v678
      %v922 = vpop.f32.mrb[0].mxu0
      %v923 = vadd.f32 %v593, %v922
      %v924 = vpop.f32.mrb[0].mxu0
      %925 = vmatprep.mubr.f32.mxu0 0.0
      %926 = vmatmul.mubr.f32.gmra.mrb[0].mxu0 %v681
      %v927 = vpop.f32.mrb[0].mxu0
      %v928 = vadd.f32 %v594, %v927
      %v929 = vpop.f32.mrb[0].mxu0
      %930 = vdwg.mxu0
      %v931 = vadd.f32 %v754, %v913
      %v932 = vadd.f32 %v759, %v918
      %v933 = vadd.f32 %v764, %v923
      %v934 = vadd.f32 %v769, %v928
      %v935 = vxor.u32 %v931, 2147483648
      %v936 = vxor.u32 %v932, 2147483648
      %v937 = vxor.u32 %v933, 2147483648
      %v938 = vxor.u32 %v934, 2147483648
      %v939 = vmul.f32 %v935, 1.442695
      %v940 = vpow.pop %v939
      %v941 = vmul.f32 %v936, 1.442695
      %v942 = vpow.pop %v941
      %v943 = vmul.f32 %v937, 1.442695
      %v944 = vpow.pop %v943
      %v945 = vmul.f32 %v938, 1.442695
      %v946 = vpow.pop %v945
      %v947 = vadd.f32 %v940, 1.0
      %v948 = vadd.f32 %v942, 1.0
      %v949 = vadd.f32 %v944, 1.0
      %v950 = vadd.f32 %v946, 1.0
      %v951 = vrcp.pop %v947
      %v952 = vmul.f32 1.0, %v951
      %v953 = vrcp.pop %v948
      %v954 = vmul.f32 1.0, %v953
      %v955 = vrcp.pop %v949
      %v956 = vmul.f32 1.0, %v955
      %v957 = vrcp.pop %v950
      %v958 = vmul.f32 1.0, %v957
      %960 = vset.pattern.permute.xlu0 0
      %961 = vperm.xlu0 %960, %v952
      %v962 = vpop.permute.xlu0 %961
      %965 = vset.pattern.permute.xlu0 0
      %966 = vperm.xlu0 %965, %v954
      %v967 = vpop.permute.xlu0 %966
      %970 = vset.pattern.permute.xlu0 0
      %971 = vperm.xlu0 %970, %v956
      %v972 = vpop.permute.xlu0 %971
      %975 = vset.pattern.permute.xlu0 0
      %976 = vperm.xlu0 %975, %v958
      %v977 = vpop.permute.xlu0 %976
      %v979 = vmul.f32 %v549, %v962
      %v980 = vmul.f32 %v550, %v962
      %v981 = vmul.f32 %v551, %v967
      %v982 = vmul.f32 %v552, %v967
      %v983 = vmul.f32 %v553, %v972
      %v984 = vmul.f32 %v554, %v972
      %v985 = vmul.f32 %v555, %v977
      %v986 = vmul.f32 %v556, %v977
      %v987 = vmax.f32 %v979, %v983
      %v988 = vmax.f32 %v981, %v985
      %v989 = vmax.f32 %v987, %v988
      %v990 = vrot.slane %v989, 4
      %v991 = vmax.f32 %v989, %v990
      %v992 = vrot.slane %v991, 2
      %v993 = vmax.f32 %v991, %v992
      %v994 = vrot.slane %v993, 1
      %v995 = vmax.f32 %v993, %v994
      %v996 = vmax.f32 %v980, %v984
      %v997 = vmax.f32 %v982, %v986
      %v998 = vmax.f32 %v996, %v997
      %v999 = vrot.slane %v998, 4
      %v1000 = vmax.f32 %v998, %v999
      %v1001 = vrot.slane %v1000, 2
      %v1002 = vmax.f32 %v1000, %v1001
      %v1003 = vrot.slane %v1002, 1
      %v1004 = vmax.f32 %v1002, %v1003
      %v1005 = vadd.f32 %v979, %v981
      %v1006 = vadd.f32 %v1005, %v983
      %v1007 = vadd.f32 %v1006, %v985
      %v1008 = vrot.slane %v1007, 4
      %v1009 = vadd.f32 %v1007, %v1008
      %v1010 = vrot.slane %v1009, 2
      %v1011 = vadd.f32 %v1009, %v1010
      %v1012 = vrot.slane %v1011, 1
      %v1013 = vadd.f32 %v1011, %v1012
      %v1014 = vadd.f32 %v980, %v982
      %v1015 = vadd.f32 %v1014, %v984
      %v1016 = vadd.f32 %v1015, %v986
      %v1017 = vrot.slane %v1016, 4
      %v1018 = vadd.f32 %v1016, %v1017
      %v1019 = vrot.slane %v1018, 2
      %v1020 = vadd.f32 %v1018, %v1019
      %v1021 = vrot.slane %v1020, 1
      %v1022 = vadd.f32 %v1020, %v1021
      %v1023 = vrcp.pop 32.0
      %v1024 = vmul.f32 %v1013, %v1023
      %v1025 = vmul.f32 %v1022, %v1023
      %v1026 = vld [vmem:[%s6] sm:$0xff]
      %v1027 = vld [vmem:[%s6 + $0x8] sm:$0xff]
      %v1028 = vld [vmem:[%s6 + $0x10] sm:$0xff]
      %v1029 = vld [vmem:[%s6 + $0x18] sm:$0xff]
      %v1030 = vld [vmem:[%s6 + $0x20] sm:$0xff]
      %v1031 = vld [vmem:[%s6 + $0x28] sm:$0xff]
      %v1032 = vld [vmem:[%s6 + $0x30] sm:$0xff]
      %v1033 = vld [vmem:[%s6 + $0x38] sm:$0xff]
      %v1034 = vld [vmem:[%s6 + $0x40] sm:$0xff]
      %v1035 = vld [vmem:[%s6 + $0x48] sm:$0xff]
      %v1036 = vld [vmem:[%s6 + $0x50] sm:$0xff]
      %v1037 = vld [vmem:[%s6 + $0x58] sm:$0xff]
      %v1038 = vld [vmem:[%s6 + $0x60] sm:$0xff]
      %v1039 = vld [vmem:[%s6 + $0x68] sm:$0xff]
      %v1040 = vld [vmem:[%s6 + $0x70] sm:$0xff]
      %v1041 = vld [vmem:[%s6 + $0x78] sm:$0xff]
      %v1042 = vld [vmem:[%s6 + $0x80] sm:$0xff]
      %v1043 = vld [vmem:[%s6 + $0x88] sm:$0xff]
      %v1044 = vld [vmem:[%s6 + $0x90] sm:$0xff]
      %v1045 = vld [vmem:[%s6 + $0x98] sm:$0xff]
      %v1046 = vld [vmem:[%s6 + $0xa0] sm:$0xff]
      %v1047 = vld [vmem:[%s6 + $0xa8] sm:$0xff]
      %v1048 = vld [vmem:[%s6 + $0xb0] sm:$0xff]
      %v1049 = vld [vmem:[%s6 + $0xb8] sm:$0xff]
      %v1050 = vld [vmem:[%s6 + $0xc0] sm:$0xff]
      %v1051 = vld [vmem:[%s6 + $0xc8] sm:$0xff]
      %v1052 = vld [vmem:[%s6 + $0xd0] sm:$0xff]
      %v1053 = vld [vmem:[%s6 + $0xd8] sm:$0xff]
      %v1054 = vld [vmem:[%s6 + $0xe0] sm:$0xff]
      %v1055 = vld [vmem:[%s6 + $0xe8] sm:$0xff]
      %v1056 = vld [vmem:[%s6 + $0xf0] sm:$0xff]
      %v1057 = vld [vmem:[%s6 + $0xf8] sm:$0xff]
      %v1058 = vld [vmem:[%s6 + $0x100] sm:$0xff]
      %v1059 = vld [vmem:[%s6 + $0x108] sm:$0xff]
      %v1060 = vld [vmem:[%s6 + $0x110] sm:$0xff]
      %v1061 = vld [vmem:[%s6 + $0x118] sm:$0xff]
      %v1062 = vld [vmem:[%s6 + $0x120] sm:$0xff]
      %v1063 = vld [vmem:[%s6 + $0x128] sm:$0xff]
      %v1064 = vld [vmem:[%s6 + $0x130] sm:$0xff]
      %v1065 = vld [vmem:[%s6 + $0x138] sm:$0xff]
      %v1066 = vld [vmem:[%s6 + $0x140] sm:$0xff]
      %v1067 = vld [vmem:[%s6 + $0x148] sm:$0xff]
      %v1068 = vld [vmem:[%s6 + $0x150] sm:$0xff]
      %v1069 = vld [vmem:[%s6 + $0x158] sm:$0xff]
      %v1070 = vld [vmem:[%s6 + $0x160] sm:$0xff]
      %v1071 = vld [vmem:[%s6 + $0x168] sm:$0xff]
      %v1072 = vld [vmem:[%s6 + $0x170] sm:$0xff]
      %v1073 = vld [vmem:[%s6 + $0x178] sm:$0xff]
      %v1074 = vld [vmem:[%s6 + $0x180] sm:$0xff]
      %v1075 = vld [vmem:[%s6 + $0x188] sm:$0xff]
      %v1076 = vld [vmem:[%s6 + $0x190] sm:$0xff]
      %v1077 = vld [vmem:[%s6 + $0x198] sm:$0xff]
      %v1078 = vld [vmem:[%s6 + $0x1a0] sm:$0xff]
      %v1079 = vld [vmem:[%s6 + $0x1a8] sm:$0xff]
      %v1080 = vld [vmem:[%s6 + $0x1b0] sm:$0xff]
      %v1081 = vld [vmem:[%s6 + $0x1b8] sm:$0xff]
      %v1082 = vld [vmem:[%s6 + $0x1c0] sm:$0xff]
      %v1083 = vld [vmem:[%s6 + $0x1c8] sm:$0xff]
      %v1084 = vld [vmem:[%s6 + $0x1d0] sm:$0xff]
      %v1085 = vld [vmem:[%s6 + $0x1d8] sm:$0xff]
      %v1086 = vld [vmem:[%s6 + $0x1e0] sm:$0xff]
      %v1087 = vld [vmem:[%s6 + $0x1e8] sm:$0xff]
      %v1088 = vld [vmem:[%s6 + $0x1f0] sm:$0xff]
      %v1089 = vld [vmem:[%s6 + $0x1f8] sm:$0xff]
      %v1090 = vld [vmem:[%s7] sm:$0xff]
      %v1091 = vld [vmem:[%s7 + $0x8] sm:$0xff]
      %v1092 = vld [vmem:[%s7 + $0x10] sm:$0xff]
      %v1093 = vld [vmem:[%s7 + $0x18] sm:$0xff]
      %v1094 = vld [vmem:[%s7 + $0x20] sm:$0xff]
      %v1095 = vld [vmem:[%s7 + $0x28] sm:$0xff]
      %v1096 = vld [vmem:[%s7 + $0x30] sm:$0xff]
      %v1097 = vld [vmem:[%s7 + $0x38] sm:$0xff]
      %v1098 = vld [vmem:[%s7 + $0x40] sm:$0xff]
      %v1099 = vld [vmem:[%s7 + $0x48] sm:$0xff]
      %v1100 = vld [vmem:[%s7 + $0x50] sm:$0xff]
      %v1101 = vld [vmem:[%s7 + $0x58] sm:$0xff]
      %v1102 = vld [vmem:[%s7 + $0x60] sm:$0xff]
      %v1103 = vld [vmem:[%s7 + $0x68] sm:$0xff]
      %v1104 = vld [vmem:[%s7 + $0x70] sm:$0xff]
      %v1105 = vld [vmem:[%s7 + $0x78] sm:$0xff]
      %v1106 = vld [vmem:[%s7 + $0x80] sm:$0xff]
      %v1107 = vld [vmem:[%s7 + $0x88] sm:$0xff]
      %v1108 = vld [vmem:[%s7 + $0x90] sm:$0xff]
      %v1109 = vld [vmem:[%s7 + $0x98] sm:$0xff]
      %v1110 = vld [vmem:[%s7 + $0xa0] sm:$0xff]
      %v1111 = vld [vmem:[%s7 + $0xa8] sm:$0xff]
      %v1112 = vld [vmem:[%s7 + $0xb0] sm:$0xff]
      %v1113 = vld [vmem:[%s7 + $0xb8] sm:$0xff]
      %v1114 = vld [vmem:[%s7 + $0xc0] sm:$0xff]
      %v1115 = vld [vmem:[%s7 + $0xc8] sm:$0xff]
      %v1116 = vld [vmem:[%s7 + $0xd0] sm:$0xff]
      %v1117 = vld [vmem:[%s7 + $0xd8] sm:$0xff]
      %v1118 = vld [vmem:[%s7 + $0xe0] sm:$0xff]
      %v1119 = vld [vmem:[%s7 + $0xe8] sm:$0xff]
      %v1120 = vld [vmem:[%s7 + $0xf0] sm:$0xff]
      %v1121 = vld [vmem:[%s7 + $0xf8] sm:$0xff]
      %v1122 = vld [vmem:[%s7 + $0x100] sm:$0xff]
      %v1123 = vld [vmem:[%s7 + $0x108] sm:$0xff]
      %v1124 = vld [vmem:[%s7 + $0x110] sm:$0xff]
      %v1125 = vld [vmem:[%s7 + $0x118] sm:$0xff]
      %v1126 = vld [vmem:[%s7 + $0x120] sm:$0xff]
      %v1127 = vld [vmem:[%s7 + $0x128] sm:$0xff]
      %v1128 = vld [vmem:[%s7 + $0x130] sm:$0xff]
      %v1129 = vld [vmem:[%s7 + $0x138] sm:$0xff]
      %v1130 = vld [vmem:[%s7 + $0x140] sm:$0xff]
      %v1131 = vld [vmem:[%s7 + $0x148] sm:$0xff]
      %v1132 = vld [vmem:[%s7 + $0x150] sm:$0xff]
      %v1133 = vld [vmem:[%s7 + $0x158] sm:$0xff]
      %v1134 = vld [vmem:[%s7 + $0x160] sm:$0xff]
      %v1135 = vld [vmem:[%s7 + $0x168] sm:$0xff]
      %v1136 = vld [vmem:[%s7 + $0x170] sm:$0xff]
      %v1137 = vld [vmem:[%s7 + $0x178] sm:$0xff]
      %v1138 = vld [vmem:[%s7 + $0x180] sm:$0xff]
      %v1139 = vld [vmem:[%s7 + $0x188] sm:$0xff]
      %v1140 = vld [vmem:[%s7 + $0x190] sm:$0xff]
      %v1141 = vld [vmem:[%s7 + $0x198] sm:$0xff]
      %v1142 = vld [vmem:[%s7 + $0x1a0] sm:$0xff]
      %v1143 = vld [vmem:[%s7 + $0x1a8] sm:$0xff]
      %v1144 = vld [vmem:[%s7 + $0x1b0] sm:$0xff]
      %v1145 = vld [vmem:[%s7 + $0x1b8] sm:$0xff]
      %v1146 = vld [vmem:[%s7 + $0x1c0] sm:$0xff]
      %v1147 = vld [vmem:[%s7 + $0x1c8] sm:$0xff]
      %v1148 = vld [vmem:[%s7 + $0x1d0] sm:$0xff]
      %v1149 = vld [vmem:[%s7 + $0x1d8] sm:$0xff]
      %v1150 = vld [vmem:[%s7 + $0x1e0] sm:$0xff]
      %v1151 = vld [vmem:[%s7 + $0x1e8] sm:$0xff]
      %v1152 = vld [vmem:[%s7 + $0x1f0] sm:$0xff]
      %v1153 = vld [vmem:[%s7 + $0x1f8] sm:$0xff]
      %1154 = vmatprep.subr.mxu0 %v1091
      %1155 = vmatpush1.msra.mxu0 %v1090
      %1156 = vmatprep.subr.mxu0 %v1093
      %1157 = vmatpush1.msra.mxu0 %v1092
      %1158 = vmatprep.subr.mxu0 %v1095
      %1159 = vmatpush1.msra.mxu0 %v1094
      %1160 = vmatprep.subr.mxu0 %v1097
      %1161 = vmatpush1.msra.mxu0 %v1096
      %1162 = vmatprep.subr.mxu0 %v1099
      %1163 = vmatpush1.msra.mxu0 %v1098
      %1164 = vmatprep.subr.mxu0 %v1101
      %1165 = vmatpush1.msra.mxu0 %v1100
      %1166 = vmatprep.subr.mxu0 %v1103
      %1167 = vmatpush1.msra.mxu0 %v1102
      %1168 = vmatprep.subr.mxu0 %v1105
      %1169 = vmatpush1.msra.mxu0 %v1104
      %1170 = vmatprep.subr.mxu0 %v1107
      %1171 = vmatpush1.msra.mxu0 %v1106
      %1172 = vmatprep.subr.mxu0 %v1109
      %1173 = vmatpush1.msra.mxu0 %v1108
      %1174 = vmatprep.subr.mxu0 %v1111
      %1175 = vmatpush1.msra.mxu0 %v1110
      %1176 = vmatprep.subr.mxu0 %v1113
      %1177 = vmatpush1.msra.mxu0 %v1112
      %1178 = vmatprep.subr.mxu0 %v1115
      %1179 = vmatpush1.msra.mxu0 %v1114
      %1180 = vmatprep.subr.mxu0 %v1117
      %1181 = vmatpush1.msra.mxu0 %v1116
      %1182 = vmatprep.subr.mxu0 %v1119
      %1183 = vmatpush1.msra.mxu0 %v1118
      %1184 = vmatprep.subr.mxu0 %v1121
      %1185 = vmatpush1.msra.mxu0 %v1120
      %1186 = vmatprep.subr.mxu0 %v1123
      %1187 = vmatpush1.msra.mxu0 %v1122
      %1188 = vmatprep.subr.mxu0 %v1125
      %1189 = vmatpush1.msra.mxu0 %v1124
      %1190 = vmatprep.subr.mxu0 %v1127
      %1191 = vmatpush1.msra.mxu0 %v1126
      %1192 = vmatprep.subr.mxu0 %v1129
      %1193 = vmatpush1.msra.mxu0 %v1128
      %1194 = vmatprep.subr.mxu0 %v1131
      %1195 = vmatpush1.msra.mxu0 %v1130
      %1196 = vmatprep.subr.mxu0 %v1133
      %1197 = vmatpush1.msra.mxu0 %v1132
      %1198 = vmatprep.subr.mxu0 %v1135
      %1199 = vmatpush1.msra.mxu0 %v1134
      %1200 = vmatprep.subr.mxu0 %v1137
      %1201 = vmatpush1.msra.mxu0 %v1136
      %1202 = vmatprep.subr.mxu0 %v1139
      %1203 = vmatpush1.msra.mxu0 %v1138
      %1204 = vmatprep.subr.mxu0 %v1141
      %1205 = vmatpush1.msra.mxu0 %v1140
      %1206 = vmatprep.subr.mxu0 %v1143
      %1207 = vmatpush1.msra.mxu0 %v1142
      %1208 = vmatprep.subr.mxu0 %v1145
      %1209 = vmatpush1.msra.mxu0 %v1144
      %1210 = vmatprep.subr.mxu0 %v1147
      %1211 = vmatpush1.msra.mxu0 %v1146
      %1212 = vmatprep.subr.mxu0 %v1149
      %1213 = vmatpush1.msra.mxu0 %v1148
      %1214 = vmatprep.subr.mxu0 %v1151
      %1215 = vmatpush1.msra.mxu0 %v1150
      %1216 = vmatprep.subr.mxu0 %v1153
      %1217 = vmatpush1.msra.mxu0 %v1152
      %1218 = vmatprep.mubr.f32.mxu0 %v1025
      %1219 = vmatmul.mubr.f32.gmra.mrb[0].mxu0 %v1024
      %v1220 = vpop.f32.mrb[0].mxu0
      %v1221 = vadd.f32 0.0, %v1220
      %v1222 = vpop.f32.mrb[0].mxu0
      %v1223 = vadd.f32 0.0, %v1222
      %1224 = vdwg.mxu0
      %1225 = vmatprep.subr.mxu0 %v1027
      %1226 = vmatpush1.msra.mxu0 %v1026
      %1227 = vmatprep.subr.mxu0 %v1029
      %1228 = vmatpush1.msra.mxu0 %v1028
      %1229 = vmatprep.subr.mxu0 %v1031
      %1230 = vmatpush1.msra.mxu0 %v1030
      %1231 = vmatprep.subr.mxu0 %v1033
      %1232 = vmatpush1.msra.mxu0 %v1032
      %1233 = vmatprep.subr.mxu0 %v1035
      %1234 = vmatpush1.msra.mxu0 %v1034
      %1235 = vmatprep.subr.mxu0 %v1037
      %1236 = vmatpush1.msra.mxu0 %v1036
      %1237 = vmatprep.subr.mxu0 %v1039
      %1238 = vmatpush1.msra.mxu0 %v1038
      %1239 = vmatprep.subr.mxu0 %v1041
      %1240 = vmatpush1.msra.mxu0 %v1040
      %1241 = vmatprep.subr.mxu0 %v1043
      %1242 = vmatpush1.msra.mxu0 %v1042
      %1243 = vmatprep.subr.mxu0 %v1045
      %1244 = vmatpush1.msra.mxu0 %v1044
      %1245 = vmatprep.subr.mxu0 %v1047
      %1246 = vmatpush1.msra.mxu0 %v1046
      %1247 = vmatprep.subr.mxu0 %v1049
      %1248 = vmatpush1.msra.mxu0 %v1048
      %1249 = vmatprep.subr.mxu0 %v1051
      %1250 = vmatpush1.msra.mxu0 %v1050
      %1251 = vmatprep.subr.mxu0 %v1053
      %1252 = vmatpush1.msra.mxu0 %v1052
      %1253 = vmatprep.subr.mxu0 %v1055
      %1254 = vmatpush1.msra.mxu0 %v1054
      %1255 = vmatprep.subr.mxu0 %v1057
      %1256 = vmatpush1.msra.mxu0 %v1056
      %1257 = vmatprep.subr.mxu0 %v1059
      %1258 = vmatpush1.msra.mxu0 %v1058
      %1259 = vmatprep.subr.mxu0 %v1061
      %1260 = vmatpush1.msra.mxu0 %v1060
      %1261 = vmatprep.subr.mxu0 %v1063
      %1262 = vmatpush1.msra.mxu0 %v1062
      %1263 = vmatprep.subr.mxu0 %v1065
      %1264 = vmatpush1.msra.mxu0 %v1064
      %1265 = vmatprep.subr.mxu0 %v1067
      %1266 = vmatpush1.msra.mxu0 %v1066
      %1267 = vmatprep.subr.mxu0 %v1069
      %1268 = vmatpush1.msra.mxu0 %v1068
      %1269 = vmatprep.subr.mxu0 %v1071
      %1270 = vmatpush1.msra.mxu0 %v1070
      %1271 = vmatprep.subr.mxu0 %v1073
      %1272 = vmatpush1.msra.mxu0 %v1072
      %1273 = vmatprep.subr.mxu0 %v1075
      %1274 = vmatpush1.msra.mxu0 %v1074
      %1275 = vmatprep.subr.mxu0 %v1077
      %1276 = vmatpush1.msra.mxu0 %v1076
      %1277 = vmatprep.subr.mxu0 %v1079
      %1278 = vmatpush1.msra.mxu0 %v1078
      %1279 = vmatprep.subr.mxu0 %v1081
      %1280 = vmatpush1.msra.mxu0 %v1080
      %1281 = vmatprep.subr.mxu0 %v1083
      %1282 = vmatpush1.msra.mxu0 %v1082
      %1283 = vmatprep.subr.mxu0 %v1085
      %1284 = vmatpush1.msra.mxu0 %v1084
      %1285 = vmatprep.subr.mxu0 %v1087
      %1286 = vmatpush1.msra.mxu0 %v1086
      %1287 = vmatprep.subr.mxu0 %v1089
      %1288 = vmatpush1.msra.mxu0 %v1088
      %1289 = vmatprep.mubr.f32.mxu0 %v1004
      %1290 = vmatmul.mubr.f32.gmra.mrb[0].mxu0 %v995
      %v1291 = vpop.f32.mrb[0].mxu0
      %v1292 = vadd.f32 %v1221, %v1291
      %v1293 = vpop.f32.mrb[0].mxu0
      %v1294 = vadd.f32 %v1223, %v1293
      %1295 = vdwg.mxu0
      %s1296 = sld [smem:[#allocation2]]
      %v1297 = vstv %s1296
      %v1298 = vadd.f32 %v1292, %v1297
      %v1299 = vadd.f32 %v1294, %v1297
      %v1300 = vxor.u32 %v1298, 2147483648
      %v1301 = vxor.u32 %v1299, 2147483648
      %v1302 = vmul.f32 %v1300, 1.442695
      %v1303 = vpow.pop %v1302
      %v1304 = vmul.f32 %v1301, 1.442695
      %v1305 = vpow.pop %v1304
      %v1306 = vadd.f32 %v1303, 1.0
      %v1307 = vadd.f32 %v1305, 1.0
      %v1308 = vrcp.pop %v1306
      %v1309 = vmul.f32 1.0, %v1308
      %v1310 = vrcp.pop %v1307
      %v1311 = vmul.f32 1.0, %v1310
      %v1312 = vlaneseq
      %v1313 = vshrl.u32 %v1312, 7
      %v1314 = vsub.s32 0, %v1313
      %v1315 = vrot.slane %v1309, %v1314
      %v1316 = vlaneseq
      %v1317 = vshrl.u32 %v1316, 7
      %v1318 = vsub.s32 0, %v1317
      %v1319 = vrot.slane %v1311, %v1318
      %v1320 = vmul.f32 %v979, %v1315
      %v1321 = vmul.f32 %v980, %v1319
      %v1322 = vmul.f32 %v981, %v1315
      %v1323 = vmul.f32 %v982, %v1319
      %v1324 = vmul.f32 %v983, %v1315
      %v1325 = vmul.f32 %v984, %v1319
      %v1326 = vmul.f32 %v985, %v1315
      %v1327 = vmul.f32 %v986, %v1319
      %v1328 = vld [vmem:[%s9] sm:$0xff]
      %v1329 = vld [vmem:[%s9 + $0x8] sm:$0xff]
      %v1330 = vld [vmem:[%s9 + $0x10] sm:$0xff]
      %v1331 = vld [vmem:[%s9 + $0x18] sm:$0xff]
      %v1332 = vld [vmem:[%s10] sm:$0xff]
      %v1333 = vld [vmem:[%s10 + $0x8] sm:$0xff]
      %v1334 = vld [vmem:[%s10 + $0x10] sm:$0xff]
      %v1335 = vld [vmem:[%s10 + $0x18] sm:$0xff]
      %1337 = vset.pattern.permute.xlu0 0
      %1338 = vperm.xlu0 %1337, %v1332
      %v1339 = vpop.permute.xlu0 %1338
      %1342 = vset.pattern.permute.xlu0 0
      %1343 = vperm.xlu0 %1342, %v1333
      %v1344 = vpop.permute.xlu0 %1343
      %1347 = vset.pattern.permute.xlu0 0
      %1348 = vperm.xlu0 %1347, %v1334
      %v1349 = vpop.permute.xlu0 %1348
      %1352 = vset.pattern.permute.xlu0 0
      %1353 = vperm.xlu0 %1352, %v1335
      %v1354 = vpop.permute.xlu0 %1353
      %v1357 = vsel %vm595, %v1328, 0
      %v1360 = vsel %vm595, %v1329, 0
      %v1363 = vsel %vm595, %v1330, 0
      %v1366 = vsel %vm595, %v1331, 0
      %1368 = vmatprep.subr.mxu0 %v1321
      %1369 = vmatpush1.msra.mxu0 %v1320
      %1370 = vmatprep.subr.mxu0 %v1323
      %1371 = vmatpush1.msra.mxu0 %v1322
      %1372 = vmatprep.subr.mxu0 %v1325
      %1373 = vmatpush1.msra.mxu0 %v1324
      %1374 = vmatprep.subr.mxu0 %v1327
      %1375 = vmatpush1.msra.mxu0 %v1326
      %1376 = vmatprep.subr.mxu0 0.0
      %1377 = vmatpush1.msra.mxu0 0.0
      %1378 = vmatprep.subr.mxu0 0.0
      %1379 = vmatpush1.msra.mxu0 0.0
      %1380 = vmatprep.subr.mxu0 0.0
      %1381 = vmatpush1.msra.mxu0 0.0
      %1382 = vmatprep.subr.mxu0 0.0
      %1383 = vmatpush1.msra.mxu0 0.0
      %1384 = vmatprep.subr.mxu0 0.0
      %1385 = vmatpush1.msra.mxu0 0.0
      %1386 = vmatprep.subr.mxu0 0.0
      %1387 = vmatpush1.msra.mxu0 0.0
      %1388 = vmatprep.subr.mxu0 0.0
      %1389 = vmatpush1.msra.mxu0 0.0
      %1390 = vmatprep.subr.mxu0 0.0
      %1391 = vmatpush1.msra.mxu0 0.0
      %1392 = vmatprep.subr.mxu0 0.0
      %1393 = vmatpush1.msra.mxu0 0.0
      %1394 = vmatprep.subr.mxu0 0.0
      %1395 = vmatpush1.msra.mxu0 0.0
      %1396 = vmatprep.subr.mxu0 0.0
      %1397 = vmatpush1.msra.mxu0 0.0
      %1398 = vmatprep.subr.mxu0 0.0
      %1399 = vmatpush1.msra.mxu0 0.0
      %1400 = vmatprep.subr.mxu0 0.0
      %1401 = vmatpush1.msra.mxu0 0.0
      %1402 = vmatprep.subr.mxu0 0.0
      %1403 = vmatpush1.msra.mxu0 0.0
      %1404 = vmatprep.subr.mxu0 0.0
      %1405 = vmatpush1.msra.mxu0 0.0
      %1406 = vmatprep.subr.mxu0 0.0
      %1407 = vmatpush1.msra.mxu0 0.0
      %1408 = vmatprep.subr.mxu0 0.0
      %1409 = vmatpush1.msra.mxu0 0.0
      %1410 = vmatprep.subr.mxu0 0.0
      %1411 = vmatpush1.msra.mxu0 0.0
      %1412 = vmatprep.subr.mxu0 0.0
      %1413 = vmatpush1.msra.mxu0 0.0
      %1414 = vmatprep.subr.mxu0 0.0
      %1415 = vmatpush1.msra.mxu0 0.0
      %1416 = vmatprep.subr.mxu0 0.0
      %1417 = vmatpush1.msra.mxu0 0.0
      %1418 = vmatprep.subr.mxu0 0.0
      %1419 = vmatpush1.msra.mxu0 0.0
      %1420 = vmatprep.subr.mxu0 0.0
      %1421 = vmatpush1.msra.mxu0 0.0
      %1422 = vmatprep.subr.mxu0 0.0
      %1423 = vmatpush1.msra.mxu0 0.0
      %1424 = vmatprep.subr.mxu0 0.0
      %1425 = vmatpush1.msra.mxu0 0.0
      %1426 = vmatprep.subr.mxu0 0.0
      %1427 = vmatpush1.msra.mxu0 0.0
      %1428 = vmatprep.subr.mxu0 0.0
      %1429 = vmatpush1.msra.mxu0 0.0
      %1430 = vmatprep.subr.mxu0 0.0
      %1431 = vmatpush1.msra.mxu0 0.0
      %1432 = vmatprep.mubr.f32.mxu0 0.0
      %1433 = vmatmul.mubr.f32.gmra.mrb[0].mxu0 %v1357
      %v1434 = vpop.f32.mrb[0].mxu0
      %v1435 = vadd.f32 %v1339, %v1434
      %v1436 = vpop.f32.mrb[0].mxu0
      %v1437 = vadd.f32 %v1339, %v1436
      %1438 = vmatprep.mubr.f32.mxu0 0.0
      %1439 = vmatmul.mubr.f32.gmra.mrb[0].mxu0 %v1360
      %v1440 = vpop.f32.mrb[0].mxu0
      %v1441 = vadd.f32 %v1344, %v1440
      %v1442 = vpop.f32.mrb[0].mxu0
      %v1443 = vadd.f32 %v1344, %v1442
      %1444 = vmatprep.mubr.f32.mxu0 0.0
      %1445 = vmatmul.mubr.f32.gmra.mrb[0].mxu0 %v1363
      %v1446 = vpop.f32.mrb[0].mxu0
      %v1447 = vadd.f32 %v1349, %v1446
      %v1448 = vpop.f32.mrb[0].mxu0
      %v1449 = vadd.f32 %v1349, %v1448
      %1450 = vmatprep.mubr.f32.mxu0 0.0
      %1451 = vmatmul.mubr.f32.gmra.mrb[0].mxu0 %v1366
      %v1452 = vpop.f32.mrb[0].mxu0
      %v1453 = vadd.f32 %v1354, %v1452
      %v1454 = vpop.f32.mrb[0].mxu0
      %v1455 = vadd.f32 %v1354, %v1454
      %1456 = vdwg.mxu0
      %v1457 = vmax.f32 %v1435, 0.0
      %v1458 = vmax.f32 %v1437, 0.0
      %v1459 = vmax.f32 %v1441, 0.0
      %v1460 = vmax.f32 %v1443, 0.0
      %v1461 = vmax.f32 %v1447, 0.0
      %v1462 = vmax.f32 %v1449, 0.0
      %v1463 = vmax.f32 %v1453, 0.0
      %v1464 = vmax.f32 %v1455, 0.0
      %v1465 = vadd.f32 %v388, %v1457
      %v1466 = vadd.f32 %v389, %v1458
      %v1467 = vadd.f32 %v390, %v1459
      %v1468 = vadd.f32 %v391, %v1460
      %v1469 = vadd.f32 %v392, %v1461
      %v1470 = vadd.f32 %v393, %v1462
      %v1471 = vadd.f32 %v394, %v1463
      %v1472 = vadd.f32 %v395, %v1464
      %1473 = vst [vmem:[%s387] sm:$0xff] %v1465
      %1474 = vst [vmem:[%s387 + $0x8] sm:$0xff] %v1466
      %1475 = vst [vmem:[%s387 + $0x10] sm:$0xff] %v1467
      %1476 = vst [vmem:[%s387 + $0x18] sm:$0xff] %v1468
      %1477 = vst [vmem:[%s387 + $0x20] sm:$0xff] %v1469
      %1478 = vst [vmem:[%s387 + $0x28] sm:$0xff] %v1470
      %1479 = vst [vmem:[%s387 + $0x30] sm:$0xff] %v1471
      %1480 = vst [vmem:[%s387 + $0x38] sm:$0xff] %v1472
      %p1481 = scmp.lt.s32.totalorder %s23, 1
      %s1482 = scalar_select %p1481, %s23, 1
      %s1483 = smul.addr %s1482, 8
      %s1484 = smul.addr %s1483, 8
      %s1485 = scalar_lea.vmem %s11, %s1484
      // Predicated region
      $region65: #{res_cbam_forward.1} parent=63 // pred_check
        %p1486 = pneg %p277
      $region66: #{res_cbam_forward.1} parent=63 // pred_check_branch
        %1488 = sbr.rel (%p1486) target = $region68
      $region67: #{res_cbam_forward.1} parent=63 // pred_region
        _
      $region68: #{res_cbam_forward.1} parent=63 // pred_fallthru
        _
    $region64: #{res_cbam_forward.1} parent=5 // pred_fallthru
      _
    %p1489 = scmp.le.s32.totalorder 2, %s18
    // Predicated region
    $region69: #{res_cbam_forward.1} parent=5 // pred_check
      %p1490 = pneg %p1489
    $region70: #{res_cbam_forward.1} parent=5 // pred_check_branch
      %1492 = sbr.rel (%p1490) target = $region72
    $region71: #{res_cbam_forward.1} parent=5 // pred_region
      %s1493 = ssub.s32 %s18, 2
      // Predicated region
      $region73: #{res_cbam_forward.1} parent=71 // pred_check
        %p1494 = pneg %p283
      $region74: #{res_cbam_forward.1} parent=71 // pred_check_branch
        %1496 = sbr.rel (%p1494) target = $region76
      $region75: #{res_cbam_forward.1} parent=71 // pred_region
        %p1497 = scmp.lt.s32.totalorder %s24, 1
        %s1498 = scalar_select %p1497, %s24, 1
        %s1499 = smul.addr %s1498, 8
        %s1500 = smul.addr %s1499, 8
        %s1501 = scalar_lea.vmem %s11, %s1500
      $region76: #{res_cbam_forward.1} parent=71 // pred_fallthru
        _
    $region72: #{res_cbam_forward.1} parent=5 // pred_fallthru
      _
  $region6: #{res_cbam_forward.1} parent=0 // loop_footer
    %s22 = sadd.s32 1, %s18
  $region7: #{res_cbam_forward.1} parent=0 // loop_footer_branch
    %17 = sbr.rel target = $region3
  $region8: #{res_cbam_forward.1} parent=0 // loop_exit
    _

</llo_original>
